<compile_context>
chip_gen: v6e
topology: v6e:2x2x1
jax: 0.10.0
libtpu: 0.0.40
codegen_flags: <defaults>
</compile_context>

<pallas_src>
from functools import partial

import jax
import jax.numpy as jnp
from jax.experimental import pallas as pl
from jax.experimental.pallas import tpu as pltpu

EPS = 1e-5          # torch nn.LayerNorm default eps
NEG_SLOPE = 0.01    # nn.LeakyReLU(0.01)

CHUNK = 256                 # lanes per compute sub-chunk (keeps vregs small on v5e)
INTERLEAVE = 2              # independent sub-chunks processed per inner iteration
PAIR = CHUNK * INTERLEAVE   # lanes consumed per inner iteration


def _ln(h):
    # LayerNorm core over the feature (sublane) axis, two-pass variance.
    # The affine (gamma, beta) is folded into the following Linear on the host.
    mean = jnp.mean(h, axis=0, keepdims=True)
    c = h - mean
    var = jnp.mean(c * c, axis=0, keepdims=True)
    return c * jax.lax.rsqrt(var + EPS)


def _leaky_relu(h):
    return jnp.where(h > 0, h, NEG_SLOPE * h)


def make_optnet_kernel(compute_dtype=jnp.float32):
    """compute_dtype: dtype of the MXU operands (f32 default; bf16 optional)."""

    def kernel(x_ref, w1_ref, ws_ref, w5_ref, b_ref, o_ref):
        # x_ref : (n_given, Bt)          batch on lanes, features on sublanes
        # w1_ref: (hidden, n_given)      fc1 weight with bn0 affine folded in
        # ws_ref: (3, hidden, hidden)    fc2, fc3, fc4 (bn1..bn3 affine folded)
        # w5_ref: (n_out_pad, hidden)    fc5 weight (bn4 affine folded), sublane-padded
        # b_ref : (b_rows, 5)            fc1..fc5 biases as columns (zero-padded rows)
        # o_ref : (n_out_pad, Bt)        first n_fit rows are the real output
        hidden = w1_ref.shape[0]
        n_out = o_ref.shape[0]

        # Hoist weights + bias lane-broadcasts once per grid step.
        w1 = w1_ref[...].astype(compute_dtype)
        w2 = ws_ref[0].astype(compute_dtype)
        w3 = ws_ref[1].astype(compute_dtype)
        w4 = ws_ref[2].astype(compute_dtype)
        w5 = w5_ref[...].astype(compute_dtype)
        b1 = b_ref[0:hidden, 0:1]
        b2 = b_ref[0:hidden, 1:2]
        b3 = b_ref[0:hidden, 2:3]
        b4 = b_ref[0:hidden, 3:4]
        b5 = b_ref[0:n_out, 4:5]

        def mxu(w, h):
            return jnp.dot(w, h.astype(compute_dtype),
                           preferred_element_type=jnp.float32)

        bt = x_ref.shape[-1]
        n_pairs = bt // PAIR  # static (block shape is compile-time)

        for p in range(n_pairs):
            base = p * PAIR
            # Two independent lane chunks; run each layer for both chunks back
            # to back so the scheduler overlaps MXU/XLU/EUP latency of one
            # chunk with the other's VPU work.
            hs = [_ln(x_ref[:, pl.ds(base + c * CHUNK, CHUNK)])          # bn0
                  for c in range(INTERLEAVE)]
            for w, b in ((w1, b1), (w2, b2), (w3, b3), (w4, b4)):
                hs = [_ln(_leaky_relu(mxu(w, h) + b)) for h in hs]       # fc_k -> lrelu -> bn_k
            for c in range(INTERLEAVE):
                out = mxu(w5, hs[c]) + b5                                # fc5
                o_ref[:, pl.ds(base + c * CHUNK, CHUNK)] = out.astype(o_ref.dtype)

    return kernel


def prepare_params(params):
    """One-time host-side packing of PyTorch-layout params.

    Folds LayerNorm affine into the following Linear:
        W @ (LN(x)*g + be) + b  ==  (W*g) @ LN_core(x) + (b + W @ be)
    and packs the 20 tiny tensors into 4 slabs.  Returns (packed, n_fit).
    """
    f32 = jnp.float32
    hidden = params["w2"].shape[0]
    n_fit = params["w5"].shape[0]
    n_out_pad = ((n_fit + 7) // 8) * 8       # sublane-aligned output rows
    b_rows = max(hidden, n_out_pad)

    def fold(w, b, g, be):
        return (w * g[None, :]).astype(f32), (b + w @ be).astype(f32)

    w1f, b1f = fold(params["w1"], params["b1"], params["g0"], params["be0"])
    w2f, b2f = fold(params["w2"], params["b2"], params["g1"], params["be1"])
    w3f, b3f = fold(params["w3"], params["b3"], params["g2"], params["be2"])
    w4f, b4f = fold(params["w4"], params["b4"], params["g3"], params["be3"])
    w5f, b5f = fold(params["w5"], params["b5"], params["g4"], params["be4"])

    w_slab = jnp.stack([w2f, w3f, w4f], axis=0)                            # (3, H, H)
    w5_pad = jnp.zeros((n_out_pad, hidden), f32).at[:n_fit, :].set(w5f)    # (n_out_pad, H)

    def col(b):
        return jnp.zeros((b_rows,), f32).at[: b.shape[0]].set(b)

    b_slab = jnp.stack([col(b1f), col(b2f), col(b3f), col(b4f), col(b5f)], axis=1)

    packed = {"w1": w1f, "ws": w_slab, "w5": w5_pad, "b": b_slab}
    return packed, n_fit


def _choose_batch_tile(batch, max_tile):
    # Aim for grid_n == 2 (feeds both v7x TensorCores; harmless on v5e/v6e),
    # cap the DMA block at max_tile, and round to whole inner sub-chunk pairs.
    tile = 128 * pl.cdiv(batch, 2 * 128)
    tile = max(min(tile, max_tile), PAIR)
    tile = PAIR * pl.cdiv(tile, PAIR)
    return tile


@partial(jax.jit, static_argnames=("n_fit", "max_batch_tile", "use_bf16"))
def optnet_forward(x, packed, *, n_fit, max_batch_tile=2048, use_bf16=False):
    """x: (B, n_given) float32.  packed: output of prepare_params()."""
    f32 = jnp.float32
    B, n_given = x.shape
    n_out_pad = packed["w5"].shape[0]

    batch_tile = _choose_batch_tile(B, max_batch_tile)
    grid_n = pl.cdiv(B, batch_tile)
    b_pad = grid_n * batch_tile

    # Transposed activation layout: batch on the 128-lane axis.
    xt = x.astype(f32).T                                                   # (n_given, B)
    if b_pad != B:
        xt = jnp.pad(xt, ((0, 0), (0, b_pad - B)))   # pad lanes = independent samples

    kernel = make_optnet_kernel(jnp.bfloat16 if use_bf16 else jnp.float32)

    out_t = pl.pallas_call(
        kernel,
        out_shape=jax.ShapeDtypeStruct((n_out_pad, b_pad), f32),
        grid=(grid_n,),
        in_specs=[
            pl.BlockSpec((n_given, batch_tile), lambda i: (0, i)),
            pl.BlockSpec(packed["w1"].shape, lambda i: (0, 0)),
            pl.BlockSpec(packed["ws"].shape, lambda i: (0, 0, 0)),
            pl.BlockSpec(packed["w5"].shape, lambda i: (0, 0)),
            pl.BlockSpec(packed["b"].shape, lambda i: (0, 0)),
        ],
        out_specs=pl.BlockSpec((n_out_pad, batch_tile), lambda i: (0, i)),
        compiler_params=pltpu.CompilerParams(
            dimension_semantics=("parallel",)),
        # VMEM is <1 MiB even at a 4096-lane block; default double buffering
        # is plenty (pl.Buffered(3) on x/o is an optional v7x tweak).
    )(xt, packed["w1"], packed["ws"], packed["w5"], packed["b"])

    return out_t[:n_fit, :B].T                                             # (B, n_fit)


def make_params(key, n_given, n_fit, hidden=20):
    """Parameters in PyTorch layout: W (out,in), b (out,), gamma/beta (features,).
    LayerNorm gamma/beta get small random perturbations (torch default is 1/0)
    so the host-side affine fold is actually exercised."""
    ks = jax.random.split(key, 16)

    def xavier(k, fan_out, fan_in):
        std = (2.0 / (fan_in + fan_out)) ** 0.5
        return std * jax.random.normal(k, (fan_out, fan_in), jnp.float32)

    def bias(k, fan_in, n):
        bound = 1.0 / (fan_in ** 0.5)
        return jax.random.uniform(k, (n,), jnp.float32, -bound, bound)

    p = {}
    dims = [(n_given, hidden), (hidden, hidden), (hidden, hidden),
            (hidden, hidden), (hidden, n_fit)]
    for li, (fi, fo) in enumerate(dims, start=1):
        p[f"w{li}"] = xavier(ks[2 * li - 2], fo, fi)
        p[f"b{li}"] = bias(ks[2 * li - 1], fi, fo)
    ln_dims = [n_given, hidden, hidden, hidden, hidden]
    for i, d in enumerate(ln_dims):
        kg, kb = jax.random.split(ks[10 + i])
        p[f"g{i}"] = 1.0 + 0.1 * jax.random.normal(kg, (d,), jnp.float32)
        p[f"be{i}"] = 0.1 * jax.random.normal(kb, (d,), jnp.float32)
    return p


def reference_forward(x, p):
    """Pure-JAX reference with the exact PyTorch forward semantics."""
    def ln(h, g, b):
        m = jnp.mean(h, axis=-1, keepdims=True)
        v = jnp.mean((h - m) ** 2, axis=-1, keepdims=True)
        return (h - m) * jax.lax.rsqrt(v + EPS) * g + b

    def lrelu(h):
        return jnp.where(h > 0, h, NEG_SLOPE * h)

    h = ln(x, p["g0"], p["be0"])
    h = ln(lrelu(h @ p["w1"].T + p["b1"]), p["g1"], p["be1"])
    h = ln(lrelu(h @ p["w2"].T + p["b2"]), p["g2"], p["be2"])
    h = ln(lrelu(h @ p["w3"].T + p["b3"]), p["g3"], p["be3"])
    h = ln(lrelu(h @ p["w4"].T + p["b4"]), p["g4"], p["be4"])
    return h @ p["w5"].T + p["b5"]


if __name__ == "__main__":
    n_given_params, n_fit_params, hidden = 8, 4, 20
    batch = 1000          # NOT a multiple of the tile -> exercises the pad path

    key = jax.random.PRNGKey(0)
    kx, kp = jax.random.split(key)
    x = jax.random.normal(kx, (batch, n_given_params), jnp.float32)
    params = make_params(kp, n_given_params, n_fit_params, hidden)

    # One-time parameter packing; per-call forward is fully jitted.
    packed, n_fit = prepare_params(params)
    packed = jax.block_until_ready(packed)

    out = optnet_forward(x, packed, n_fit=n_fit)
    out = jax.block_until_ready(out)
    # Second call hits the jit cache (steady-state path).
    out = jax.block_until_ready(optnet_forward(x, packed, n_fit=n_fit))

    ref = reference_forward(x, params)
    assert out.shape == (batch, n_fit_params)
    max_err = float(jnp.max(jnp.abs(out - ref)))
    assert jnp.allclose(out, ref, atol=1e-4, rtol=1e-4), f"mismatch vs reference, max_err={max_err}"

    print("KERNEL_OK")
</pallas_src>

<mosaic_0001>
module attributes {stable_mosaic.version = 11 : i64} {
  func.func @kernel(%arg0: i32, %arg1: memref<8x512xf32, #tpu.memory_space<vmem>>, %arg2: memref<20x8xf32, #tpu.memory_space<vmem>>, %arg3: memref<3x20x20xf32, #tpu.memory_space<vmem>>, %arg4: memref<8x20xf32, #tpu.memory_space<vmem>>, %arg5: memref<20x5xf32, #tpu.memory_space<vmem>>, %arg6: memref<8x512xf32, #tpu.memory_space<vmem>>) attributes {dimension_semantics = [#tpu.dimension_semantics<parallel>], iteration_bounds = array<i64: 2>, scalar_prefetch = 0 : i64, scratch_operands = 0 : i64, tpu.core_type = #tpu.core_type<tc>, window_params = [{transform_indices = @transform_0, window_bounds = array<i64: 8, 512>}, {pipeline_mode = #tpu.pipeline_mode<synchronous>, transform_indices = @transform_1, window_bounds = array<i64: 20, 8>}, {pipeline_mode = #tpu.pipeline_mode<synchronous>, transform_indices = @transform_2, window_bounds = array<i64: 3, 20, 20>}, {pipeline_mode = #tpu.pipeline_mode<synchronous>, transform_indices = @transform_3, window_bounds = array<i64: 8, 20>}, {pipeline_mode = #tpu.pipeline_mode<synchronous>, transform_indices = @transform_4, window_bounds = array<i64: 20, 5>}, {transform_indices = @transform_5, window_bounds = array<i64: 8, 512>}]} {
    %c0 = arith.constant 0 : index
    %c0_0 = arith.constant 0 : index
    %0 = vector.load %arg2[%c0, %c0_0] : memref<20x8xf32, #tpu.memory_space<vmem>>, vector<20x8xf32>
    %c0_1 = arith.constant 0 : index
    %c0_2 = arith.constant 0 : index
    %c0_3 = arith.constant 0 : index
    %1 = vector.load %arg3[%c0_1, %c0_2, %c0_3] : memref<3x20x20xf32, #tpu.memory_space<vmem>>, vector<1x20x20xf32>
    %2 = vector.shape_cast %1 : vector<1x20x20xf32> to vector<20x20xf32>
    %c1 = arith.constant 1 : index
    %c0_4 = arith.constant 0 : index
    %c0_5 = arith.constant 0 : index
    %3 = vector.load %arg3[%c1, %c0_4, %c0_5] : memref<3x20x20xf32, #tpu.memory_space<vmem>>, vector<1x20x20xf32>
    %4 = vector.shape_cast %3 : vector<1x20x20xf32> to vector<20x20xf32>
    %c2 = arith.constant 2 : index
    %c0_6 = arith.constant 0 : index
    %c0_7 = arith.constant 0 : index
    %5 = vector.load %arg3[%c2, %c0_6, %c0_7] : memref<3x20x20xf32, #tpu.memory_space<vmem>>, vector<1x20x20xf32>
    %6 = vector.shape_cast %5 : vector<1x20x20xf32> to vector<20x20xf32>
    %c0_8 = arith.constant 0 : index
    %c0_9 = arith.constant 0 : index
    %7 = vector.load %arg4[%c0_8, %c0_9] : memref<8x20xf32, #tpu.memory_space<vmem>>, vector<8x20xf32>
    %c0_10 = arith.constant 0 : index
    %c0_11 = arith.constant 0 : index
    %8 = vector.load %arg5[%c0_10, %c0_11] : memref<20x5xf32, #tpu.memory_space<vmem>>, vector<20x1xf32>
    %c0_12 = arith.constant 0 : index
    %c1_13 = arith.constant 1 : index
    %9 = vector.load %arg5[%c0_12, %c1_13] : memref<20x5xf32, #tpu.memory_space<vmem>>, vector<20x1xf32>
    %c0_14 = arith.constant 0 : index
    %c2_15 = arith.constant 2 : index
    %10 = vector.load %arg5[%c0_14, %c2_15] : memref<20x5xf32, #tpu.memory_space<vmem>>, vector<20x1xf32>
    %c0_16 = arith.constant 0 : index
    %c3 = arith.constant 3 : index
    %11 = vector.load %arg5[%c0_16, %c3] : memref<20x5xf32, #tpu.memory_space<vmem>>, vector<20x1xf32>
    %c0_17 = arith.constant 0 : index
    %c4 = arith.constant 4 : index
    %12 = vector.load %arg5[%c0_17, %c4] : memref<20x5xf32, #tpu.memory_space<vmem>>, vector<8x1xf32>
    %c0_18 = arith.constant 0 : index
    %c0_19 = arith.constant 0 : index
    %13 = vector.load %arg1[%c0_18, %c0_19] : memref<8x512xf32, #tpu.memory_space<vmem>>, vector<8x256xf32>
    %cst = arith.constant dense<0.000000e+00> : vector<256xf32>
    %14 = vector.multi_reduction <add>, %13, %cst [0] : vector<8x256xf32> to vector<256xf32>
    %15 = vector.shape_cast %14 : vector<256xf32> to vector<1x256xf32>
    %cst_20 = arith.constant 8.000000e+00 : f32
    %16 = vector.broadcast %cst_20 : f32 to vector<1x256xf32>
    %17 = arith.divf %15, %16 : vector<1x256xf32>
    %18 = vector.broadcast %17 : vector<1x256xf32> to vector<8x256xf32>
    %19 = arith.subf %13, %18 : vector<8x256xf32>
    %20 = arith.mulf %19, %19 : vector<8x256xf32>
    %cst_21 = arith.constant dense<0.000000e+00> : vector<256xf32>
    %21 = vector.multi_reduction <add>, %20, %cst_21 [0] : vector<8x256xf32> to vector<256xf32>
    %22 = vector.shape_cast %21 : vector<256xf32> to vector<1x256xf32>
    %cst_22 = arith.constant 8.000000e+00 : f32
    %23 = vector.broadcast %cst_22 : f32 to vector<1x256xf32>
    %24 = arith.divf %22, %23 : vector<1x256xf32>
    %cst_23 = arith.constant 9.99999974E-6 : f32
    %25 = vector.broadcast %cst_23 : f32 to vector<1x256xf32>
    %26 = arith.addf %24, %25 : vector<1x256xf32>
    %27 = math.rsqrt %26 : vector<1x256xf32>
    %28 = vector.broadcast %27 : vector<1x256xf32> to vector<8x256xf32>
    %29 = arith.mulf %19, %28 : vector<8x256xf32>
    %c0_24 = arith.constant 0 : index
    %c256 = arith.constant 256 : index
    %30 = vector.load %arg1[%c0_24, %c256] : memref<8x512xf32, #tpu.memory_space<vmem>>, vector<8x256xf32>
    %cst_25 = arith.constant dense<0.000000e+00> : vector<256xf32>
    %31 = vector.multi_reduction <add>, %30, %cst_25 [0] : vector<8x256xf32> to vector<256xf32>
    %32 = vector.shape_cast %31 : vector<256xf32> to vector<1x256xf32>
    %cst_26 = arith.constant 8.000000e+00 : f32
    %33 = vector.broadcast %cst_26 : f32 to vector<1x256xf32>
    %34 = arith.divf %32, %33 : vector<1x256xf32>
    %35 = vector.broadcast %34 : vector<1x256xf32> to vector<8x256xf32>
    %36 = arith.subf %30, %35 : vector<8x256xf32>
    %37 = arith.mulf %36, %36 : vector<8x256xf32>
    %cst_27 = arith.constant dense<0.000000e+00> : vector<256xf32>
    %38 = vector.multi_reduction <add>, %37, %cst_27 [0] : vector<8x256xf32> to vector<256xf32>
    %39 = vector.shape_cast %38 : vector<256xf32> to vector<1x256xf32>
    %cst_28 = arith.constant 8.000000e+00 : f32
    %40 = vector.broadcast %cst_28 : f32 to vector<1x256xf32>
    %41 = arith.divf %39, %40 : vector<1x256xf32>
    %cst_29 = arith.constant 9.99999974E-6 : f32
    %42 = vector.broadcast %cst_29 : f32 to vector<1x256xf32>
    %43 = arith.addf %41, %42 : vector<1x256xf32>
    %44 = math.rsqrt %43 : vector<1x256xf32>
    %45 = vector.broadcast %44 : vector<1x256xf32> to vector<8x256xf32>
    %46 = arith.mulf %36, %45 : vector<8x256xf32>
    %cst_30 = arith.constant dense<0.000000e+00> : vector<20x256xf32>
    %47 = tpu.matmul %0, %29, %cst_30 {dimension_numbers = #tpu.dot_dimension_numbers<[1], [0], [0], [1], [0, 0, 1, 1], [], []>} : vector<20x8xf32>, vector<8x256xf32>, vector<20x256xf32> -> vector<20x256xf32>
    %48 = vector.broadcast %8 : vector<20x1xf32> to vector<20x256xf32>
    %49 = arith.addf %47, %48 : vector<20x256xf32>
    %cst_31 = arith.constant 0.000000e+00 : f32
    %50 = vector.broadcast %cst_31 : f32 to vector<20x256xf32>
    %51 = arith.cmpf ogt, %49, %50 : vector<20x256xf32>
    %cst_32 = arith.constant 0.00999999977 : f32
    %52 = vector.broadcast %cst_32 : f32 to vector<20x256xf32>
    %53 = arith.mulf %52, %49 : vector<20x256xf32>
    %54 = arith.select %51, %49, %53 : vector<20x256xi1>, vector<20x256xf32>
    %cst_33 = arith.constant dense<0.000000e+00> : vector<256xf32>
    %55 = vector.multi_reduction <add>, %54, %cst_33 [0] : vector<20x256xf32> to vector<256xf32>
    %56 = vector.shape_cast %55 : vector<256xf32> to vector<1x256xf32>
    %cst_34 = arith.constant 2.000000e+01 : f32
    %57 = vector.broadcast %cst_34 : f32 to vector<1x256xf32>
    %58 = arith.divf %56, %57 : vector<1x256xf32>
    %59 = vector.broadcast %58 : vector<1x256xf32> to vector<20x256xf32>
    %60 = arith.subf %54, %59 : vector<20x256xf32>
    %61 = arith.mulf %60, %60 : vector<20x256xf32>
    %cst_35 = arith.constant dense<0.000000e+00> : vector<256xf32>
    %62 = vector.multi_reduction <add>, %61, %cst_35 [0] : vector<20x256xf32> to vector<256xf32>
    %63 = vector.shape_cast %62 : vector<256xf32> to vector<1x256xf32>
    %cst_36 = arith.constant 2.000000e+01 : f32
    %64 = vector.broadcast %cst_36 : f32 to vector<1x256xf32>
    %65 = arith.divf %63, %64 : vector<1x256xf32>
    %cst_37 = arith.constant 9.99999974E-6 : f32
    %66 = vector.broadcast %cst_37 : f32 to vector<1x256xf32>
    %67 = arith.addf %65, %66 : vector<1x256xf32>
    %68 = math.rsqrt %67 : vector<1x256xf32>
    %69 = vector.broadcast %68 : vector<1x256xf32> to vector<20x256xf32>
    %70 = arith.mulf %60, %69 : vector<20x256xf32>
    %cst_38 = arith.constant dense<0.000000e+00> : vector<20x256xf32>
    %71 = tpu.matmul %0, %46, %cst_38 {dimension_numbers = #tpu.dot_dimension_numbers<[1], [0], [0], [1], [0, 0, 1, 1], [], []>} : vector<20x8xf32>, vector<8x256xf32>, vector<20x256xf32> -> vector<20x256xf32>
    %72 = vector.broadcast %8 : vector<20x1xf32> to vector<20x256xf32>
    %73 = arith.addf %71, %72 : vector<20x256xf32>
    %cst_39 = arith.constant 0.000000e+00 : f32
    %74 = vector.broadcast %cst_39 : f32 to vector<20x256xf32>
    %75 = arith.cmpf ogt, %73, %74 : vector<20x256xf32>
    %cst_40 = arith.constant 0.00999999977 : f32
    %76 = vector.broadcast %cst_40 : f32 to vector<20x256xf32>
    %77 = arith.mulf %76, %73 : vector<20x256xf32>
    %78 = arith.select %75, %73, %77 : vector<20x256xi1>, vector<20x256xf32>
    %cst_41 = arith.constant dense<0.000000e+00> : vector<256xf32>
    %79 = vector.multi_reduction <add>, %78, %cst_41 [0] : vector<20x256xf32> to vector<256xf32>
    %80 = vector.shape_cast %79 : vector<256xf32> to vector<1x256xf32>
    %cst_42 = arith.constant 2.000000e+01 : f32
    %81 = vector.broadcast %cst_42 : f32 to vector<1x256xf32>
    %82 = arith.divf %80, %81 : vector<1x256xf32>
    %83 = vector.broadcast %82 : vector<1x256xf32> to vector<20x256xf32>
    %84 = arith.subf %78, %83 : vector<20x256xf32>
    %85 = arith.mulf %84, %84 : vector<20x256xf32>
    %cst_43 = arith.constant dense<0.000000e+00> : vector<256xf32>
    %86 = vector.multi_reduction <add>, %85, %cst_43 [0] : vector<20x256xf32> to vector<256xf32>
    %87 = vector.shape_cast %86 : vector<256xf32> to vector<1x256xf32>
    %cst_44 = arith.constant 2.000000e+01 : f32
    %88 = vector.broadcast %cst_44 : f32 to vector<1x256xf32>
    %89 = arith.divf %87, %88 : vector<1x256xf32>
    %cst_45 = arith.constant 9.99999974E-6 : f32
    %90 = vector.broadcast %cst_45 : f32 to vector<1x256xf32>
    %91 = arith.addf %89, %90 : vector<1x256xf32>
    %92 = math.rsqrt %91 : vector<1x256xf32>
    %93 = vector.broadcast %92 : vector<1x256xf32> to vector<20x256xf32>
    %94 = arith.mulf %84, %93 : vector<20x256xf32>
    %cst_46 = arith.constant dense<0.000000e+00> : vector<20x256xf32>
    %95 = tpu.matmul %2, %70, %cst_46 {dimension_numbers = #tpu.dot_dimension_numbers<[1], [0], [0], [1], [0, 0, 1, 1], [], []>} : vector<20x20xf32>, vector<20x256xf32>, vector<20x256xf32> -> vector<20x256xf32>
    %96 = vector.broadcast %9 : vector<20x1xf32> to vector<20x256xf32>
    %97 = arith.addf %95, %96 : vector<20x256xf32>
    %cst_47 = arith.constant 0.000000e+00 : f32
    %98 = vector.broadcast %cst_47 : f32 to vector<20x256xf32>
    %99 = arith.cmpf ogt, %97, %98 : vector<20x256xf32>
    %cst_48 = arith.constant 0.00999999977 : f32
    %100 = vector.broadcast %cst_48 : f32 to vector<20x256xf32>
    %101 = arith.mulf %100, %97 : vector<20x256xf32>
    %102 = arith.select %99, %97, %101 : vector<20x256xi1>, vector<20x256xf32>
    %cst_49 = arith.constant dense<0.000000e+00> : vector<256xf32>
    %103 = vector.multi_reduction <add>, %102, %cst_49 [0] : vector<20x256xf32> to vector<256xf32>
    %104 = vector.shape_cast %103 : vector<256xf32> to vector<1x256xf32>
    %cst_50 = arith.constant 2.000000e+01 : f32
    %105 = vector.broadcast %cst_50 : f32 to vector<1x256xf32>
    %106 = arith.divf %104, %105 : vector<1x256xf32>
    %107 = vector.broadcast %106 : vector<1x256xf32> to vector<20x256xf32>
    %108 = arith.subf %102, %107 : vector<20x256xf32>
    %109 = arith.mulf %108, %108 : vector<20x256xf32>
    %cst_51 = arith.constant dense<0.000000e+00> : vector<256xf32>
    %110 = vector.multi_reduction <add>, %109, %cst_51 [0] : vector<20x256xf32> to vector<256xf32>
    %111 = vector.shape_cast %110 : vector<256xf32> to vector<1x256xf32>
    %cst_52 = arith.constant 2.000000e+01 : f32
    %112 = vector.broadcast %cst_52 : f32 to vector<1x256xf32>
    %113 = arith.divf %111, %112 : vector<1x256xf32>
    %cst_53 = arith.constant 9.99999974E-6 : f32
    %114 = vector.broadcast %cst_53 : f32 to vector<1x256xf32>
    %115 = arith.addf %113, %114 : vector<1x256xf32>
    %116 = math.rsqrt %115 : vector<1x256xf32>
    %117 = vector.broadcast %116 : vector<1x256xf32> to vector<20x256xf32>
    %118 = arith.mulf %108, %117 : vector<20x256xf32>
    %cst_54 = arith.constant dense<0.000000e+00> : vector<20x256xf32>
    %119 = tpu.matmul %2, %94, %cst_54 {dimension_numbers = #tpu.dot_dimension_numbers<[1], [0], [0], [1], [0, 0, 1, 1], [], []>} : vector<20x20xf32>, vector<20x256xf32>, vector<20x256xf32> -> vector<20x256xf32>
    %120 = vector.broadcast %9 : vector<20x1xf32> to vector<20x256xf32>
    %121 = arith.addf %119, %120 : vector<20x256xf32>
    %cst_55 = arith.constant 0.000000e+00 : f32
    %122 = vector.broadcast %cst_55 : f32 to vector<20x256xf32>
    %123 = arith.cmpf ogt, %121, %122 : vector<20x256xf32>
    %cst_56 = arith.constant 0.00999999977 : f32
    %124 = vector.broadcast %cst_56 : f32 to vector<20x256xf32>
    %125 = arith.mulf %124, %121 : vector<20x256xf32>
    %126 = arith.select %123, %121, %125 : vector<20x256xi1>, vector<20x256xf32>
    %cst_57 = arith.constant dense<0.000000e+00> : vector<256xf32>
    %127 = vector.multi_reduction <add>, %126, %cst_57 [0] : vector<20x256xf32> to vector<256xf32>
    %128 = vector.shape_cast %127 : vector<256xf32> to vector<1x256xf32>
    %cst_58 = arith.constant 2.000000e+01 : f32
    %129 = vector.broadcast %cst_58 : f32 to vector<1x256xf32>
    %130 = arith.divf %128, %129 : vector<1x256xf32>
    %131 = vector.broadcast %130 : vector<1x256xf32> to vector<20x256xf32>
    %132 = arith.subf %126, %131 : vector<20x256xf32>
    %133 = arith.mulf %132, %132 : vector<20x256xf32>
    %cst_59 = arith.constant dense<0.000000e+00> : vector<256xf32>
    %134 = vector.multi_reduction <add>, %133, %cst_59 [0] : vector<20x256xf32> to vector<256xf32>
    %135 = vector.shape_cast %134 : vector<256xf32> to vector<1x256xf32>
    %cst_60 = arith.constant 2.000000e+01 : f32
    %136 = vector.broadcast %cst_60 : f32 to vector<1x256xf32>
    %137 = arith.divf %135, %136 : vector<1x256xf32>
    %cst_61 = arith.constant 9.99999974E-6 : f32
    %138 = vector.broadcast %cst_61 : f32 to vector<1x256xf32>
    %139 = arith.addf %137, %138 : vector<1x256xf32>
    %140 = math.rsqrt %139 : vector<1x256xf32>
    %141 = vector.broadcast %140 : vector<1x256xf32> to vector<20x256xf32>
    %142 = arith.mulf %132, %141 : vector<20x256xf32>
    %cst_62 = arith.constant dense<0.000000e+00> : vector<20x256xf32>
    %143 = tpu.matmul %4, %118, %cst_62 {dimension_numbers = #tpu.dot_dimension_numbers<[1], [0], [0], [1], [0, 0, 1, 1], [], []>} : vector<20x20xf32>, vector<20x256xf32>, vector<20x256xf32> -> vector<20x256xf32>
    %144 = vector.broadcast %10 : vector<20x1xf32> to vector<20x256xf32>
    %145 = arith.addf %143, %144 : vector<20x256xf32>
    %cst_63 = arith.constant 0.000000e+00 : f32
    %146 = vector.broadcast %cst_63 : f32 to vector<20x256xf32>
    %147 = arith.cmpf ogt, %145, %146 : vector<20x256xf32>
    %cst_64 = arith.constant 0.00999999977 : f32
    %148 = vector.broadcast %cst_64 : f32 to vector<20x256xf32>
    %149 = arith.mulf %148, %145 : vector<20x256xf32>
    %150 = arith.select %147, %145, %149 : vector<20x256xi1>, vector<20x256xf32>
    %cst_65 = arith.constant dense<0.000000e+00> : vector<256xf32>
    %151 = vector.multi_reduction <add>, %150, %cst_65 [0] : vector<20x256xf32> to vector<256xf32>
    %152 = vector.shape_cast %151 : vector<256xf32> to vector<1x256xf32>
    %cst_66 = arith.constant 2.000000e+01 : f32
    %153 = vector.broadcast %cst_66 : f32 to vector<1x256xf32>
    %154 = arith.divf %152, %153 : vector<1x256xf32>
    %155 = vector.broadcast %154 : vector<1x256xf32> to vector<20x256xf32>
    %156 = arith.subf %150, %155 : vector<20x256xf32>
    %157 = arith.mulf %156, %156 : vector<20x256xf32>
    %cst_67 = arith.constant dense<0.000000e+00> : vector<256xf32>
    %158 = vector.multi_reduction <add>, %157, %cst_67 [0] : vector<20x256xf32> to vector<256xf32>
    %159 = vector.shape_cast %158 : vector<256xf32> to vector<1x256xf32>
    %cst_68 = arith.constant 2.000000e+01 : f32
    %160 = vector.broadcast %cst_68 : f32 to vector<1x256xf32>
    %161 = arith.divf %159, %160 : vector<1x256xf32>
    %cst_69 = arith.constant 9.99999974E-6 : f32
    %162 = vector.broadcast %cst_69 : f32 to vector<1x256xf32>
    %163 = arith.addf %161, %162 : vector<1x256xf32>
    %164 = math.rsqrt %163 : vector<1x256xf32>
    %165 = vector.broadcast %164 : vector<1x256xf32> to vector<20x256xf32>
    %166 = arith.mulf %156, %165 : vector<20x256xf32>
    %cst_70 = arith.constant dense<0.000000e+00> : vector<20x256xf32>
    %167 = tpu.matmul %4, %142, %cst_70 {dimension_numbers = #tpu.dot_dimension_numbers<[1], [0], [0], [1], [0, 0, 1, 1], [], []>} : vector<20x20xf32>, vector<20x256xf32>, vector<20x256xf32> -> vector<20x256xf32>
    %168 = vector.broadcast %10 : vector<20x1xf32> to vector<20x256xf32>
    %169 = arith.addf %167, %168 : vector<20x256xf32>
    %cst_71 = arith.constant 0.000000e+00 : f32
    %170 = vector.broadcast %cst_71 : f32 to vector<20x256xf32>
    %171 = arith.cmpf ogt, %169, %170 : vector<20x256xf32>
    %cst_72 = arith.constant 0.00999999977 : f32
    %172 = vector.broadcast %cst_72 : f32 to vector<20x256xf32>
    %173 = arith.mulf %172, %169 : vector<20x256xf32>
    %174 = arith.select %171, %169, %173 : vector<20x256xi1>, vector<20x256xf32>
    %cst_73 = arith.constant dense<0.000000e+00> : vector<256xf32>
    %175 = vector.multi_reduction <add>, %174, %cst_73 [0] : vector<20x256xf32> to vector<256xf32>
    %176 = vector.shape_cast %175 : vector<256xf32> to vector<1x256xf32>
    %cst_74 = arith.constant 2.000000e+01 : f32
    %177 = vector.broadcast %cst_74 : f32 to vector<1x256xf32>
    %178 = arith.divf %176, %177 : vector<1x256xf32>
    %179 = vector.broadcast %178 : vector<1x256xf32> to vector<20x256xf32>
    %180 = arith.subf %174, %179 : vector<20x256xf32>
    %181 = arith.mulf %180, %180 : vector<20x256xf32>
    %cst_75 = arith.constant dense<0.000000e+00> : vector<256xf32>
    %182 = vector.multi_reduction <add>, %181, %cst_75 [0] : vector<20x256xf32> to vector<256xf32>
    %183 = vector.shape_cast %182 : vector<256xf32> to vector<1x256xf32>
    %cst_76 = arith.constant 2.000000e+01 : f32
    %184 = vector.broadcast %cst_76 : f32 to vector<1x256xf32>
    %185 = arith.divf %183, %184 : vector<1x256xf32>
    %cst_77 = arith.constant 9.99999974E-6 : f32
    %186 = vector.broadcast %cst_77 : f32 to vector<1x256xf32>
    %187 = arith.addf %185, %186 : vector<1x256xf32>
    %188 = math.rsqrt %187 : vector<1x256xf32>
    %189 = vector.broadcast %188 : vector<1x256xf32> to vector<20x256xf32>
    %190 = arith.mulf %180, %189 : vector<20x256xf32>
    %cst_78 = arith.constant dense<0.000000e+00> : vector<20x256xf32>
    %191 = tpu.matmul %6, %166, %cst_78 {dimension_numbers = #tpu.dot_dimension_numbers<[1], [0], [0], [1], [0, 0, 1, 1], [], []>} : vector<20x20xf32>, vector<20x256xf32>, vector<20x256xf32> -> vector<20x256xf32>
    %192 = vector.broadcast %11 : vector<20x1xf32> to vector<20x256xf32>
    %193 = arith.addf %191, %192 : vector<20x256xf32>
    %cst_79 = arith.constant 0.000000e+00 : f32
    %194 = vector.broadcast %cst_79 : f32 to vector<20x256xf32>
    %195 = arith.cmpf ogt, %193, %194 : vector<20x256xf32>
    %cst_80 = arith.constant 0.00999999977 : f32
    %196 = vector.broadcast %cst_80 : f32 to vector<20x256xf32>
    %197 = arith.mulf %196, %193 : vector<20x256xf32>
    %198 = arith.select %195, %193, %197 : vector<20x256xi1>, vector<20x256xf32>
    %cst_81 = arith.constant dense<0.000000e+00> : vector<256xf32>
    %199 = vector.multi_reduction <add>, %198, %cst_81 [0] : vector<20x256xf32> to vector<256xf32>
    %200 = vector.shape_cast %199 : vector<256xf32> to vector<1x256xf32>
    %cst_82 = arith.constant 2.000000e+01 : f32
    %201 = vector.broadcast %cst_82 : f32 to vector<1x256xf32>
    %202 = arith.divf %200, %201 : vector<1x256xf32>
    %203 = vector.broadcast %202 : vector<1x256xf32> to vector<20x256xf32>
    %204 = arith.subf %198, %203 : vector<20x256xf32>
    %205 = arith.mulf %204, %204 : vector<20x256xf32>
    %cst_83 = arith.constant dense<0.000000e+00> : vector<256xf32>
    %206 = vector.multi_reduction <add>, %205, %cst_83 [0] : vector<20x256xf32> to vector<256xf32>
    %207 = vector.shape_cast %206 : vector<256xf32> to vector<1x256xf32>
    %cst_84 = arith.constant 2.000000e+01 : f32
    %208 = vector.broadcast %cst_84 : f32 to vector<1x256xf32>
    %209 = arith.divf %207, %208 : vector<1x256xf32>
    %cst_85 = arith.constant 9.99999974E-6 : f32
    %210 = vector.broadcast %cst_85 : f32 to vector<1x256xf32>
    %211 = arith.addf %209, %210 : vector<1x256xf32>
    %212 = math.rsqrt %211 : vector<1x256xf32>
    %213 = vector.broadcast %212 : vector<1x256xf32> to vector<20x256xf32>
    %214 = arith.mulf %204, %213 : vector<20x256xf32>
    %cst_86 = arith.constant dense<0.000000e+00> : vector<20x256xf32>
    %215 = tpu.matmul %6, %190, %cst_86 {dimension_numbers = #tpu.dot_dimension_numbers<[1], [0], [0], [1], [0, 0, 1, 1], [], []>} : vector<20x20xf32>, vector<20x256xf32>, vector<20x256xf32> -> vector<20x256xf32>
    %216 = vector.broadcast %11 : vector<20x1xf32> to vector<20x256xf32>
    %217 = arith.addf %215, %216 : vector<20x256xf32>
    %cst_87 = arith.constant 0.000000e+00 : f32
    %218 = vector.broadcast %cst_87 : f32 to vector<20x256xf32>
    %219 = arith.cmpf ogt, %217, %218 : vector<20x256xf32>
    %cst_88 = arith.constant 0.00999999977 : f32
    %220 = vector.broadcast %cst_88 : f32 to vector<20x256xf32>
    %221 = arith.mulf %220, %217 : vector<20x256xf32>
    %222 = arith.select %219, %217, %221 : vector<20x256xi1>, vector<20x256xf32>
    %cst_89 = arith.constant dense<0.000000e+00> : vector<256xf32>
    %223 = vector.multi_reduction <add>, %222, %cst_89 [0] : vector<20x256xf32> to vector<256xf32>
    %224 = vector.shape_cast %223 : vector<256xf32> to vector<1x256xf32>
    %cst_90 = arith.constant 2.000000e+01 : f32
    %225 = vector.broadcast %cst_90 : f32 to vector<1x256xf32>
    %226 = arith.divf %224, %225 : vector<1x256xf32>
    %227 = vector.broadcast %226 : vector<1x256xf32> to vector<20x256xf32>
    %228 = arith.subf %222, %227 : vector<20x256xf32>
    %229 = arith.mulf %228, %228 : vector<20x256xf32>
    %cst_91 = arith.constant dense<0.000000e+00> : vector<256xf32>
    %230 = vector.multi_reduction <add>, %229, %cst_91 [0] : vector<20x256xf32> to vector<256xf32>
    %231 = vector.shape_cast %230 : vector<256xf32> to vector<1x256xf32>
    %cst_92 = arith.constant 2.000000e+01 : f32
    %232 = vector.broadcast %cst_92 : f32 to vector<1x256xf32>
    %233 = arith.divf %231, %232 : vector<1x256xf32>
    %cst_93 = arith.constant 9.99999974E-6 : f32
    %234 = vector.broadcast %cst_93 : f32 to vector<1x256xf32>
    %235 = arith.addf %233, %234 : vector<1x256xf32>
    %236 = math.rsqrt %235 : vector<1x256xf32>
    %237 = vector.broadcast %236 : vector<1x256xf32> to vector<20x256xf32>
    %238 = arith.mulf %228, %237 : vector<20x256xf32>
    %cst_94 = arith.constant dense<0.000000e+00> : vector<8x256xf32>
    %239 = tpu.matmul %7, %214, %cst_94 {dimension_numbers = #tpu.dot_dimension_numbers<[1], [0], [0], [1], [0, 0, 1, 1], [], []>} : vector<8x20xf32>, vector<20x256xf32>, vector<8x256xf32> -> vector<8x256xf32>
    %240 = vector.broadcast %12 : vector<8x1xf32> to vector<8x256xf32>
    %241 = arith.addf %239, %240 : vector<8x256xf32>
    %c0_95 = arith.constant 0 : index
    %c0_96 = arith.constant 0 : index
    %242 = vector.load %arg6[%c0_95, %c0_96] : memref<8x512xf32, #tpu.memory_space<vmem>>, vector<8x256xf32>
    tpu.vector_store %arg6[%c0_95, %c0_96], %241 {strides = array<i32>} : memref<8x512xf32, #tpu.memory_space<vmem>>, vector<8x256xf32>,
    %cst_97 = arith.constant dense<0.000000e+00> : vector<8x256xf32>
    %243 = tpu.matmul %7, %238, %cst_97 {dimension_numbers = #tpu.dot_dimension_numbers<[1], [0], [0], [1], [0, 0, 1, 1], [], []>} : vector<8x20xf32>, vector<20x256xf32>, vector<8x256xf32> -> vector<8x256xf32>
    %244 = vector.broadcast %12 : vector<8x1xf32> to vector<8x256xf32>
    %245 = arith.addf %243, %244 : vector<8x256xf32>
    %c0_98 = arith.constant 0 : index
    %c256_99 = arith.constant 256 : index
    %246 = vector.load %arg6[%c0_98, %c256_99] : memref<8x512xf32, #tpu.memory_space<vmem>>, vector<8x256xf32>
    tpu.vector_store %arg6[%c0_98, %c256_99], %245 {strides = array<i32>} : memref<8x512xf32, #tpu.memory_space<vmem>>, vector<8x256xf32>,
    return
  }
  func.func @transform_0(%arg0: i32) -> (i32, i32) {
    %c0_i32 = arith.constant 0 : i32
    %c0_i32_0 = arith.constant 0 : i32
    return %c0_i32, %arg0 : i32, i32
  }
  func.func @transform_1(%arg0: i32) -> (i32, i32) {
    %c0_i32 = arith.constant 0 : i32
    %c0_i32_0 = arith.constant 0 : i32
    %c0_i32_1 = arith.constant 0 : i32
    return %c0_i32, %c0_i32_0 : i32, i32
  }
  func.func @transform_2(%arg0: i32) -> (i32, i32, i32) {
    %c0_i32 = arith.constant 0 : i32
    %c0_i32_0 = arith.constant 0 : i32
    %c0_i32_1 = arith.constant 0 : i32
    %c0_i32_2 = arith.constant 0 : i32
    return %c0_i32, %c0_i32_0, %c0_i32_1 : i32, i32, i32
  }
  func.func @transform_3(%arg0: i32) -> (i32, i32) {
    %c0_i32 = arith.constant 0 : i32
    %c0_i32_0 = arith.constant 0 : i32
    %c0_i32_1 = arith.constant 0 : i32
    return %c0_i32, %c0_i32_0 : i32, i32
  }
  func.func @transform_4(%arg0: i32) -> (i32, i32) {
    %c0_i32 = arith.constant 0 : i32
    %c0_i32_0 = arith.constant 0 : i32
    %c0_i32_1 = arith.constant 0 : i32
    return %c0_i32, %c0_i32_0 : i32, i32
  }
  func.func @transform_5(%arg0: i32) -> (i32, i32) {
    %c0_i32 = arith.constant 0 : i32
    %c0_i32_0 = arith.constant 0 : i32
    return %c0_i32, %arg0 : i32, i32
  }
}

</mosaic_0001>

<llo_original>
// kernel: optnet_forward.1
$region0: #{optnet_forward.1}
  #allocation0 [shape = 'u32[]', space=smem, size = 0x4, offset = 0x4, fixed_abs, tag = 'smem constant byte address 0x4 - core index']
  #allocation1 [shape = 'u32[144,128]{1,0:T(1,128)}', space=vmem, size = 0x12000, scoped, tag = 'internal scratch']
  %s0 = inlined_call_operand.vmem [shape: f32[8,1024], index: 0, kind: input, shape index: {}]
  %s1 = inlined_call_operand.vmem [shape: f32[20,8], index: 1, kind: input, shape index: {}]
  %s2 = inlined_call_operand.vmem [shape: f32[3,20,20], index: 2, kind: input, shape index: {}]
  %s3 = inlined_call_operand.vmem [shape: f32[8,20], index: 3, kind: input, shape index: {}]
  %s4 = inlined_call_operand.vmem [shape: f32[20,5], index: 4, kind: input, shape index: {}]
  %s5 = inlined_call_operand.vmem [shape: f32[8,1024], index: 5, kind: output, shape index: {}]
  %s6 = sld [smem:[#allocation0]]
  $region53: #{optnet_forward.1} parent=0
    _
  %s8 = ssub.s32 1, %s6
  %s9 = scalar_select 0, %s8, %s6
  loop: start=0, step=1, limit=4
  $region2: #{optnet_forward.1} parent=0 // loop_pre_header
    _
  $region3: #{optnet_forward.1} parent=0 // loop_header
    %s11 = sphi 0, %s15
    %p12 = scmp.ge.s32.totalorder %s11, 4
    %s21 = sphi 0, %s23
    %s24 = sphi 0, %s21
    %s25 = sphi 0, %s24
    %s41 = sphi 0, %s25
    %s45 = sphi 0, %s45
    %s47 = sphi 0, %s45
    %s48 = sphi 0, %s47
    %s62 = sphi 0, %s48
    %s66 = sphi 0, %s66
    %s68 = sphi 0, %s66
    %s69 = sphi 0, %s68
    %s83 = sphi 0, %s69
    %s87 = sphi 0, %s87
    %s89 = sphi 0, %s87
    %s90 = sphi 0, %s89
    %s104 = sphi 0, %s90
    %s108 = sphi 0, %s108
    %s110 = sphi 0, %s108
    %s111 = sphi 0, %s110
    %s125 = sphi 0, %s111
    %s131 = sphi 0, %s133
    %s134 = sphi 0, %s131
    %s135 = sphi 0, %s134
    %s151 = sphi 0, %s135
  $region4: #{optnet_forward.1} parent=0 // loop_header_branch
    %14 = sbr.rel (%p12) target = $region8
  $region5: #{optnet_forward.1} parent=0 // loop_body
    %s16 = ssub.s32 %s11, 1
    %s17 = ssub.s32 %s11, 2
    %s18 = sadd.s32 %s11, 1
    %s19 = ssub.s32 %s11, %s18
    %p20 = scmp.eq.s32.totalorder %s19, 0
    %s22 = sadd.s32 %s21, 1
    %s23 = scalar_select %p20, %s21, %s22
    %p26 = pneg %p20
    %p27 = scmp.eq.s32.totalorder %s11, 1
    %p28 = por %p26, %p27
    %p29 = scmp.ne.s32.totalorder %s21, %s24
    %p30 = scmp.eq.s32.totalorder %s11, 0
    %p31 = por %p29, %p30
    %p32 = scmp.ne.s32.totalorder %s21, %s24
    %p33 = scmp.eq.s32.totalorder %s16, 1
    %p34 = por %p32, %p33
    %p35 = scmp.ne.s32.totalorder %s24, %s25
    %p36 = scmp.eq.s32.totalorder %s16, 0
    %p37 = por %p35, %p36
    %p38 = scmp.ne.s32.totalorder %s24, %s25
    %p39 = scmp.eq.s32.totalorder %s17, 1
    %p40 = por %p38, %p39
    %p42 = scmp.ne.s32.totalorder %s25, %s41
    %p43 = scmp.eq.s32.totalorder %s17, 0
    %p44 = por %p42, %p43
    %s46 = sadd.s32 %s45, 1
    %p49 = scmp.eq.s32.totalorder %s11, 1
    %p50 = scmp.ne.s32.totalorder %s45, %s47
    %p51 = scmp.eq.s32.totalorder %s11, 0
    %p52 = por %p50, %p51
    %p53 = scmp.ne.s32.totalorder %s45, %s47
    %p54 = scmp.eq.s32.totalorder %s16, 1
    %p55 = por %p53, %p54
    %p56 = scmp.ne.s32.totalorder %s47, %s48
    %p57 = scmp.eq.s32.totalorder %s16, 0
    %p58 = por %p56, %p57
    %p59 = scmp.ne.s32.totalorder %s47, %s48
    %p60 = scmp.eq.s32.totalorder %s17, 1
    %p61 = por %p59, %p60
    %p63 = scmp.ne.s32.totalorder %s48, %s62
    %p64 = scmp.eq.s32.totalorder %s17, 0
    %p65 = por %p63, %p64
    %s67 = sadd.s32 %s66, 1
    %p70 = scmp.eq.s32.totalorder %s11, 1
    %p71 = scmp.ne.s32.totalorder %s66, %s68
    %p72 = scmp.eq.s32.totalorder %s11, 0
    %p73 = por %p71, %p72
    %p74 = scmp.ne.s32.totalorder %s66, %s68
    %p75 = scmp.eq.s32.totalorder %s16, 1
    %p76 = por %p74, %p75
    %p77 = scmp.ne.s32.totalorder %s68, %s69
    %p78 = scmp.eq.s32.totalorder %s16, 0
    %p79 = por %p77, %p78
    %p80 = scmp.ne.s32.totalorder %s68, %s69
    %p81 = scmp.eq.s32.totalorder %s17, 1
    %p82 = por %p80, %p81
    %p84 = scmp.ne.s32.totalorder %s69, %s83
    %p85 = scmp.eq.s32.totalorder %s17, 0
    %p86 = por %p84, %p85
    %s88 = sadd.s32 %s87, 1
    %p91 = scmp.eq.s32.totalorder %s11, 1
    %p92 = scmp.ne.s32.totalorder %s87, %s89
    %p93 = scmp.eq.s32.totalorder %s11, 0
    %p94 = por %p92, %p93
    %p95 = scmp.ne.s32.totalorder %s87, %s89
    %p96 = scmp.eq.s32.totalorder %s16, 1
    %p97 = por %p95, %p96
    %p98 = scmp.ne.s32.totalorder %s89, %s90
    %p99 = scmp.eq.s32.totalorder %s16, 0
    %p100 = por %p98, %p99
    %p101 = scmp.ne.s32.totalorder %s89, %s90
    %p102 = scmp.eq.s32.totalorder %s17, 1
    %p103 = por %p101, %p102
    %p105 = scmp.ne.s32.totalorder %s90, %s104
    %p106 = scmp.eq.s32.totalorder %s17, 0
    %p107 = por %p105, %p106
    %s109 = sadd.s32 %s108, 1
    %p112 = scmp.eq.s32.totalorder %s11, 1
    %p113 = scmp.ne.s32.totalorder %s108, %s110
    %p114 = scmp.eq.s32.totalorder %s11, 0
    %p115 = por %p113, %p114
    %p116 = scmp.ne.s32.totalorder %s108, %s110
    %p117 = scmp.eq.s32.totalorder %s16, 1
    %p118 = por %p116, %p117
    %p119 = scmp.ne.s32.totalorder %s110, %s111
    %p120 = scmp.eq.s32.totalorder %s16, 0
    %p121 = por %p119, %p120
    %p122 = scmp.ne.s32.totalorder %s110, %s111
    %p123 = scmp.eq.s32.totalorder %s17, 1
    %p124 = por %p122, %p123
    %p126 = scmp.ne.s32.totalorder %s111, %s125
    %p127 = scmp.eq.s32.totalorder %s17, 0
    %p128 = por %p126, %p127
    %s129 = ssub.s32 %s11, %s18
    %p130 = scmp.eq.s32.totalorder %s129, 0
    %s132 = sadd.s32 %s131, 1
    %s133 = scalar_select %p130, %s131, %s132
    %p136 = pneg %p130
    %p137 = scmp.eq.s32.totalorder %s11, 1
    %p138 = por %p136, %p137
    %p139 = scmp.ne.s32.totalorder %s131, %s134
    %p140 = scmp.eq.s32.totalorder %s11, 0
    %p141 = por %p139, %p140
    %p142 = scmp.ne.s32.totalorder %s131, %s134
    %p143 = scmp.eq.s32.totalorder %s16, 1
    %p144 = por %p142, %p143
    %p145 = scmp.ne.s32.totalorder %s134, %s135
    %p146 = scmp.eq.s32.totalorder %s16, 0
    %p147 = por %p145, %p146
    %p148 = scmp.ne.s32.totalorder %s134, %s135
    %p149 = scmp.eq.s32.totalorder %s17, 1
    %p150 = por %p148, %p149
    %p152 = scmp.ne.s32.totalorder %s135, %s151
    %p153 = scmp.eq.s32.totalorder %s17, 0
    %p154 = por %p152, %p153
    %p155 = scmp.le.s32.totalorder 1, %s11
    %p156 = scmp.lt.s32.totalorder %s11, 3
    %p157 = pnand %p155, %p156
    %p158 = pneg %p157
    // Predicated region
    $region9: #{optnet_forward.1} parent=5 // pred_check
      _
    $region10: #{optnet_forward.1} parent=5 // pred_check_branch
      %160 = sbr.rel (%p157) target = $region12
    $region11: #{optnet_forward.1} parent=5 // pred_region
      %s161 = ssub.s32 %s11, 1
      // Predicated region
      $region13: #{optnet_forward.1} parent=11 // pred_check
        %p162 = pneg %p58
      $region14: #{optnet_forward.1} parent=11 // pred_check_branch
        %164 = sbr.rel (%p162) target = $region16
      $region15: #{optnet_forward.1} parent=11 // pred_region
        _
      $region16: #{optnet_forward.1} parent=11 // pred_fallthru
        _
      // Predicated region
      $region17: #{optnet_forward.1} parent=11 // pred_check
        %p165 = pneg %p79
      $region18: #{optnet_forward.1} parent=11 // pred_check_branch
        %167 = sbr.rel (%p165) target = $region20
      $region19: #{optnet_forward.1} parent=11 // pred_region
        _
      $region20: #{optnet_forward.1} parent=11 // pred_fallthru
        _
      // Predicated region
      $region21: #{optnet_forward.1} parent=11 // pred_check
        %p168 = pneg %p100
      $region22: #{optnet_forward.1} parent=11 // pred_check_branch
        %170 = sbr.rel (%p168) target = $region24
      $region23: #{optnet_forward.1} parent=11 // pred_region
        _
      $region24: #{optnet_forward.1} parent=11 // pred_fallthru
        _
      // Predicated region
      $region25: #{optnet_forward.1} parent=11 // pred_check
        %p171 = pneg %p121
      $region26: #{optnet_forward.1} parent=11 // pred_check_branch
        %173 = sbr.rel (%p171) target = $region28
      $region27: #{optnet_forward.1} parent=11 // pred_region
        _
      $region28: #{optnet_forward.1} parent=11 // pred_fallthru
        _
    $region12: #{optnet_forward.1} parent=5 // pred_fallthru
      _
    %p174 = scmp.lt.s32.totalorder %s11, 2
    // Predicated region
    $region29: #{optnet_forward.1} parent=5 // pred_check
      %p175 = pneg %p174
    $region30: #{optnet_forward.1} parent=5 // pred_check_branch
      %177 = sbr.rel (%p175) target = $region32
    $region31: #{optnet_forward.1} parent=5 // pred_region
      // Predicated region
      $region33: #{optnet_forward.1} parent=31 // pred_check
        %p178 = pneg %p31
      $region34: #{optnet_forward.1} parent=31 // pred_check_branch
        %180 = sbr.rel (%p178) target = $region36
      $region35: #{optnet_forward.1} parent=31 // pred_region
        %s181 = smul.u32 4, %s11
        %p182 = scmp.lt.s32.totalorder %s181, 7
        %s183 = scalar_select %p182, %s181, 7
        %s184 = smul.addr %s183, 8
        %s185 = scalar_lea.vmem %s0, %s184
        %s186 = smul.u32 4, %s11
      $region36: #{optnet_forward.1} parent=31 // pred_fallthru
        _
    $region32: #{optnet_forward.1} parent=5 // pred_fallthru
      _
    %p187 = scmp.le.s32.totalorder 1, %s11
    %p188 = scmp.lt.s32.totalorder %s11, 3
    %p189 = pnand %p187, %p188
    %p190 = pneg %p189
    // Predicated region
    $region37: #{optnet_forward.1} parent=5 // pred_check
      _
    $region38: #{optnet_forward.1} parent=5 // pred_check_branch
      %192 = sbr.rel (%p189) target = $region40
    $region39: #{optnet_forward.1} parent=5 // pred_region
      %s193 = ssub.s32 %s11, 1
      %s194 = smul.u32 4, %s16
      %p195 = scmp.lt.s32.totalorder %s194, 7
      %s196 = scalar_select %p195, %s194, 7
      %s197 = smul.addr %s196, 8
      %s198 = scalar_lea.vmem %s0, %s197
      %p199 = pneg %p37
      %p200 = pneg %p34
      %p201 = pneg %p58
      %p202 = pneg %p55
      %p203 = pneg %p79
      %p204 = pneg %p76
      %p205 = pneg %p100
      %p206 = pneg %p97
      %p207 = pneg %p121
      %p208 = pneg %p118
      %p209 = pneg %p147
      %p210 = pneg %p144
      %s211 = smul.u32 4, %s16
      %p212 = scmp.lt.s32.totalorder %s211, 7
      %s213 = scalar_select %p212, %s211, 7
      %s214 = smul.addr %s213, 8
      %s215 = scalar_lea.vmem %s5, %s214
      %s216 = smul.u32 4, %s16
      %p217 = scmp.lt.s32.totalorder %s216, 7
      %s218 = scalar_select %p217, %s216, 7
      %s219 = smul.addr %s218, 8
      %s220 = scalar_lea.vmem %s0, %s219
      %s221 = smul.u32 4, %s16
      %s222 = smul.u32 4, %s16
      %p223 = scmp.lt.s32.totalorder %s222, 7
      %s224 = scalar_select %p223, %s222, 7
      %s225 = smul.addr %s224, 8
      %s226 = scalar_lea.vmem %s5, %s225
      %s227 = smul.u32 4, %s16
      %v228 = vld [vmem:[%s1] sm:$0xff]
      %v229 = vld [vmem:[%s1 + $0x8] sm:$0xff]
      %v230 = vld [vmem:[%s1 + $0x10] sm:$0xf]
      %v231 = vld [vmem:[%s2] sm:$0xff]
      %v232 = vld [vmem:[%s2 + $0x8] sm:$0xff]
      %v233 = vld [vmem:[%s2 + $0x10] sm:$0xf]
      %s234 = scalar_lea.vmem %s2, 24
      %v235 = vld [vmem:[%s234] sm:$0xff]
      %v236 = vld [vmem:[%s234 + $0x8] sm:$0xff]
      %v237 = vld [vmem:[%s234 + $0x10] sm:$0xf]
      %s238 = scalar_lea.vmem %s2, 48
      %v239 = vld [vmem:[%s238] sm:$0xff]
      %v240 = vld [vmem:[%s238 + $0x8] sm:$0xff]
      %v241 = vld [vmem:[%s238 + $0x10] sm:$0xf]
      %v242 = vld [vmem:[%s3] sm:$0xff]
      %v243 = vld [vmem:[%s4] sm:$0xff]
      %v244 = vld [vmem:[%s4 + $0x8] sm:$0xff]
      %v245 = vld [vmem:[%s4 + $0x10] sm:$0xf]
      %v246 = vld [vmem:[%s220] sm:$0xff]
      %v247 = vld [vmem:[%s220 + $0x8] sm:$0xff]
      %v248 = vrot.slane %v246, 4
      %v249 = vadd.f32 %v246, %v248
      %v250 = vrot.slane %v249, 2
      %v251 = vadd.f32 %v249, %v250
      %v252 = vrot.slane %v251, 1
      %v253 = vadd.f32 %v251, %v252
      %v254 = vrot.slane %v247, 4
      %v255 = vadd.f32 %v247, %v254
      %v256 = vrot.slane %v255, 2
      %v257 = vadd.f32 %v255, %v256
      %v258 = vrot.slane %v257, 1
      %v259 = vadd.f32 %v257, %v258
      %v260 = vrcp.pop 8.0
      %v261 = vmul.f32 %v253, %v260
      %v262 = vmul.f32 %v259, %v260
      %v263 = vsub.f32 %v246, %v261
      %v264 = vsub.f32 %v247, %v262
      %v265 = vmul.f32 %v263, %v263
      %v266 = vmul.f32 %v264, %v264
      %v267 = vrot.slane %v265, 4
      %v268 = vadd.f32 %v265, %v267
      %v269 = vrot.slane %v268, 2
      %v270 = vadd.f32 %v268, %v269
      %v271 = vrot.slane %v270, 1
      %v272 = vadd.f32 %v270, %v271
      %v273 = vrot.slane %v266, 4
      %v274 = vadd.f32 %v266, %v273
      %v275 = vrot.slane %v274, 2
      %v276 = vadd.f32 %v274, %v275
      %v277 = vrot.slane %v276, 1
      %v278 = vadd.f32 %v276, %v277
      %v279 = vmul.f32 %v272, %v260
      %v280 = vmul.f32 %v278, %v260
      %v281 = vadd.f32 %v279, 1e-05
      %v282 = vadd.f32 %v280, 1e-05
      %v283 = vrsqrt.pop %v281
      %v284 = vrsqrt.pop %v282
      %v285 = vmul.f32 %v263, %v283
      %v286 = vmul.f32 %v264, %v284
      %v287 = vld [vmem:[%s220 + $0x10] sm:$0xff]
      %v288 = vld [vmem:[%s220 + $0x18] sm:$0xff]
      %v289 = vrot.slane %v287, 4
      %v290 = vadd.f32 %v287, %v289
      %v291 = vrot.slane %v290, 2
      %v292 = vadd.f32 %v290, %v291
      %v293 = vrot.slane %v292, 1
      %v294 = vadd.f32 %v292, %v293
      %v295 = vrot.slane %v288, 4
      %v296 = vadd.f32 %v288, %v295
      %v297 = vrot.slane %v296, 2
      %v298 = vadd.f32 %v296, %v297
      %v299 = vrot.slane %v298, 1
      %v300 = vadd.f32 %v298, %v299
      %v301 = vmul.f32 %v294, %v260
      %v302 = vmul.f32 %v300, %v260
      %v303 = vsub.f32 %v287, %v301
      %v304 = vsub.f32 %v288, %v302
      %v305 = vmul.f32 %v303, %v303
      %v306 = vmul.f32 %v304, %v304
      %v307 = vrot.slane %v305, 4
      %v308 = vadd.f32 %v305, %v307
      %v309 = vrot.slane %v308, 2
      %v310 = vadd.f32 %v308, %v309
      %v311 = vrot.slane %v310, 1
      %v312 = vadd.f32 %v310, %v311
      %v313 = vrot.slane %v306, 4
      %v314 = vadd.f32 %v306, %v313
      %v315 = vrot.slane %v314, 2
      %v316 = vadd.f32 %v314, %v315
      %v317 = vrot.slane %v316, 1
      %v318 = vadd.f32 %v316, %v317
      %v319 = vmul.f32 %v312, %v260
      %v320 = vmul.f32 %v318, %v260
      %v321 = vadd.f32 %v319, 1e-05
      %v322 = vadd.f32 %v320, 1e-05
      %v323 = vrsqrt.pop %v321
      %v324 = vrsqrt.pop %v322
      %v325 = vmul.f32 %v303, %v323
      %v326 = vmul.f32 %v304, %v324
      %328 = vset.pattern.permute.xlu0 0
      %329 = vperm.xlu0 %328, %v243
      %v330 = vpop.permute.xlu0 %329
      %333 = vset.pattern.permute.xlu0 0
      %334 = vperm.xlu0 %333, %v244
      %v335 = vpop.permute.xlu0 %334
      %338 = vset.pattern.permute.xlu0 0
      %339 = vperm.xlu0 %338, %v245
      %v340 = vpop.permute.xlu0 %339
      %vm342 = vcmask 64512
      %v344 = vsel %vm342, %v228, 0
      %v347 = vsel %vm342, %v229, 0
      %v350 = vsel %vm342, %v230, 0
      %352 = vmatprep.subr.mxu0 0.0
      %353 = vmatpush1.msra.mxu0 0.0
      %354 = vmatprep.subr.mxu0 0.0
      %355 = vmatpush1.msra.mxu0 0.0
      %356 = vmatprep.subr.mxu0 0.0
      %357 = vmatpush1.msra.mxu0 0.0
      %358 = vmatprep.subr.mxu0 0.0
      %359 = vmatpush1.msra.mxu0 0.0
      %360 = vmatprep.subr.mxu0 0.0
      %361 = vmatpush1.msra.mxu0 0.0
      %362 = vmatprep.subr.mxu0 0.0
      %363 = vmatpush1.msra.mxu0 0.0
      %364 = vmatprep.subr.mxu0 0.0
      %365 = vmatpush1.msra.mxu0 0.0
      %366 = vmatprep.subr.mxu0 0.0
      %367 = vmatpush1.msra.mxu0 0.0
      %368 = vmatprep.subr.mxu0 0.0
      %369 = vmatpush1.msra.mxu0 0.0
      %370 = vmatprep.subr.mxu0 0.0
      %371 = vmatpush1.msra.mxu0 0.0
      %372 = vmatprep.subr.mxu0 0.0
      %373 = vmatpush1.msra.mxu0 0.0
      %374 = vmatprep.subr.mxu0 0.0
      %375 = vmatpush1.msra.mxu0 0.0
      %376 = vmatprep.subr.mxu0 0.0
      %377 = vmatpush1.msra.mxu0 0.0
      %378 = vmatprep.subr.mxu0 0.0
      %379 = vmatpush1.msra.mxu0 0.0
      %380 = vmatprep.subr.mxu0 0.0
      %381 = vmatpush1.msra.mxu0 0.0
      %382 = vmatprep.subr.mxu0 %v286
      %383 = vmatpush1.msra.mxu0 %v285
      %384 = vmatprep.subr.mxu0 0.0
      %385 = vmatpush2.msra.mxu0 0.0
      %386 = vmatprep.subr.mxu0 0.0
      %387 = vmatpush2.msra.mxu0 0.0
      %388 = vmatprep.subr.mxu0 0.0
      %389 = vmatpush2.msra.mxu0 0.0
      %390 = vmatprep.subr.mxu0 0.0
      %391 = vmatpush2.msra.mxu0 0.0
      %392 = vmatprep.subr.mxu0 0.0
      %393 = vmatpush2.msra.mxu0 0.0
      %394 = vmatprep.subr.mxu0 0.0
      %395 = vmatpush2.msra.mxu0 0.0
      %396 = vmatprep.subr.mxu0 0.0
      %397 = vmatpush2.msra.mxu0 0.0
      %398 = vmatprep.subr.mxu0 0.0
      %399 = vmatpush2.msra.mxu0 0.0
      %400 = vmatprep.subr.mxu0 0.0
      %401 = vmatpush2.msra.mxu0 0.0
      %402 = vmatprep.subr.mxu0 0.0
      %403 = vmatpush2.msra.mxu0 0.0
      %404 = vmatprep.subr.mxu0 0.0
      %405 = vmatpush2.msra.mxu0 0.0
      %406 = vmatprep.subr.mxu0 0.0
      %407 = vmatpush2.msra.mxu0 0.0
      %408 = vmatprep.subr.mxu0 0.0
      %409 = vmatpush2.msra.mxu0 0.0
      %410 = vmatprep.subr.mxu0 0.0
      %411 = vmatpush2.msra.mxu0 0.0
      %412 = vmatprep.subr.mxu0 0.0
      %413 = vmatpush2.msra.mxu0 0.0
      %414 = vmatprep.subr.mxu0 0.0
      %415 = vmatpush2.msra.mxu0 0.0
      %416 = vmatprep.mubr.f32.mxu0 0.0
      %417 = vmatmul.mubr.f32.gmra.mxu0 %v344
      %v418 = vpop.f32.mrf.mxu0
      %v419 = vadd.f32 %v330, %v418
      %v420 = vpop.f32.mrf.mxu0
      %v421 = vadd.f32 %v330, %v420
      %422 = vmatprep.mubr.f32.mxu0 0.0
      %423 = vmatmul.mubr.f32.gmra.mxu0 %v347
      %v424 = vpop.f32.mrf.mxu0
      %v425 = vadd.f32 %v335, %v424
      %v426 = vpop.f32.mrf.mxu0
      %v427 = vadd.f32 %v335, %v426
      %428 = vmatprep.mubr.f32.mxu0 0.0
      %429 = vmatmul.mubr.f32.gmra.mxu0 %v350
      %v430 = vpop.f32.mrf.mxu0
      %v431 = vadd.f32 %v340, %v430
      %v432 = vpop.f32.mrf.mxu0
      %v433 = vadd.f32 %v340, %v432
      %434 = vdwg.mxu0
      %vm435 = vcmp.gt.f32.partialorder %v419, 0.0
      %vm436 = vcmp.gt.f32.partialorder %v421, 0.0
      %vm437 = vcmp.gt.f32.partialorder %v425, 0.0
      %vm438 = vcmp.gt.f32.partialorder %v427, 0.0
      %vm439 = vcmp.gt.f32.partialorder %v431, 0.0
      %vm440 = vcmp.gt.f32.partialorder %v433, 0.0
      %v441 = vmul.f32 %v419, 0.01
      %v442 = vmul.f32 %v421, 0.01
      %v443 = vmul.f32 %v425, 0.01
      %v444 = vmul.f32 %v427, 0.01
      %v445 = vmul.f32 %v431, 0.01
      %v446 = vmul.f32 %v433, 0.01
      %v447 = vsel %vm435, %v419, %v441
      %v448 = vsel %vm436, %v421, %v442
      %v449 = vsel %vm437, %v425, %v443
      %v450 = vsel %vm438, %v427, %v444
      %v451 = vsel %vm439, %v431, %v445
      %v452 = vsel %vm440, %v433, %v446
      %v453 = vadd.f32 %v447, %v449
      %vm454 = vcmask 1043456
      %v455 = vsel %vm454, %v451, 0.0
      %v456 = vadd.f32 %v453, %v455
      %v457 = vrot.slane %v456, 4
      %v458 = vadd.f32 %v456, %v457
      %v459 = vrot.slane %v458, 2
      %v460 = vadd.f32 %v458, %v459
      %v461 = vrot.slane %v460, 1
      %v462 = vadd.f32 %v460, %v461
      %v463 = vadd.f32 %v448, %v450
      %v464 = vsel %vm454, %v452, 0.0
      %v465 = vadd.f32 %v463, %v464
      %v466 = vrot.slane %v465, 4
      %v467 = vadd.f32 %v465, %v466
      %v468 = vrot.slane %v467, 2
      %v469 = vadd.f32 %v467, %v468
      %v470 = vrot.slane %v469, 1
      %v471 = vadd.f32 %v469, %v470
      %v472 = vrcp.pop 20.0
      %v473 = vmul.f32 %v462, %v472
      %v474 = vmul.f32 %v471, %v472
      %v475 = vsub.f32 %v447, %v473
      %v476 = vsub.f32 %v448, %v474
      %v477 = vsub.f32 %v449, %v473
      %v478 = vsub.f32 %v450, %v474
      %v479 = vsub.f32 %v451, %v473
      %v480 = vsub.f32 %v452, %v474
      %v481 = vmul.f32 %v475, %v475
      %v482 = vmul.f32 %v476, %v476
      %v483 = vmul.f32 %v477, %v477
      %v484 = vmul.f32 %v478, %v478
      %v485 = vmul.f32 %v479, %v479
      %v486 = vmul.f32 %v480, %v480
      %v487 = vadd.f32 %v481, %v483
      %v488 = vsel %vm454, %v485, 0.0
      %v489 = vadd.f32 %v487, %v488
      %v490 = vrot.slane %v489, 4
      %v491 = vadd.f32 %v489, %v490
      %v492 = vrot.slane %v491, 2
      %v493 = vadd.f32 %v491, %v492
      %v494 = vrot.slane %v493, 1
      %v495 = vadd.f32 %v493, %v494
      %v496 = vadd.f32 %v482, %v484
      %v497 = vsel %vm454, %v486, 0.0
      %v498 = vadd.f32 %v496, %v497
      %v499 = vrot.slane %v498, 4
      %v500 = vadd.f32 %v498, %v499
      %v501 = vrot.slane %v500, 2
      %v502 = vadd.f32 %v500, %v501
      %v503 = vrot.slane %v502, 1
      %v504 = vadd.f32 %v502, %v503
      %v505 = vmul.f32 %v495, %v472
      %v506 = vmul.f32 %v504, %v472
      %v507 = vadd.f32 %v505, 1e-05
      %v508 = vadd.f32 %v506, 1e-05
      %v509 = vrsqrt.pop %v507
      %v510 = vrsqrt.pop %v508
      %v511 = vmul.f32 %v475, %v509
      %v512 = vmul.f32 %v476, %v510
      %v513 = vmul.f32 %v477, %v509
      %v514 = vmul.f32 %v478, %v510
      %v515 = vmul.f32 %v479, %v509
      %v516 = vmul.f32 %v480, %v510
      %517 = vmatprep.subr.mxu0 0.0
      %518 = vmatpush1.msra.mxu0 0.0
      %519 = vmatprep.subr.mxu0 0.0
      %520 = vmatpush1.msra.mxu0 0.0
      %521 = vmatprep.subr.mxu0 0.0
      %522 = vmatpush1.msra.mxu0 0.0
      %523 = vmatprep.subr.mxu0 0.0
      %524 = vmatpush1.msra.mxu0 0.0
      %525 = vmatprep.subr.mxu0 0.0
      %526 = vmatpush1.msra.mxu0 0.0
      %527 = vmatprep.subr.mxu0 0.0
      %528 = vmatpush1.msra.mxu0 0.0
      %529 = vmatprep.subr.mxu0 0.0
      %530 = vmatpush1.msra.mxu0 0.0
      %531 = vmatprep.subr.mxu0 0.0
      %532 = vmatpush1.msra.mxu0 0.0
      %533 = vmatprep.subr.mxu0 0.0
      %534 = vmatpush1.msra.mxu0 0.0
      %535 = vmatprep.subr.mxu0 0.0
      %536 = vmatpush1.msra.mxu0 0.0
      %537 = vmatprep.subr.mxu0 0.0
      %538 = vmatpush1.msra.mxu0 0.0
      %539 = vmatprep.subr.mxu0 0.0
      %540 = vmatpush1.msra.mxu0 0.0
      %541 = vmatprep.subr.mxu0 0.0
      %542 = vmatpush1.msra.mxu0 0.0
      %543 = vmatprep.subr.mxu0 0.0
      %544 = vmatpush1.msra.mxu0 0.0
      %545 = vmatprep.subr.mxu0 0.0
      %546 = vmatpush1.msra.mxu0 0.0
      %547 = vmatprep.subr.mxu0 %v326
      %548 = vmatpush1.msra.mxu0 %v325
      %549 = vmatprep.subr.mxu0 0.0
      %550 = vmatpush2.msra.mxu0 0.0
      %551 = vmatprep.subr.mxu0 0.0
      %552 = vmatpush2.msra.mxu0 0.0
      %553 = vmatprep.subr.mxu0 0.0
      %554 = vmatpush2.msra.mxu0 0.0
      %555 = vmatprep.subr.mxu0 0.0
      %556 = vmatpush2.msra.mxu0 0.0
      %557 = vmatprep.subr.mxu0 0.0
      %558 = vmatpush2.msra.mxu0 0.0
      %559 = vmatprep.subr.mxu0 0.0
      %560 = vmatpush2.msra.mxu0 0.0
      %561 = vmatprep.subr.mxu0 0.0
      %562 = vmatpush2.msra.mxu0 0.0
      %563 = vmatprep.subr.mxu0 0.0
      %564 = vmatpush2.msra.mxu0 0.0
      %565 = vmatprep.subr.mxu0 0.0
      %566 = vmatpush2.msra.mxu0 0.0
      %567 = vmatprep.subr.mxu0 0.0
      %568 = vmatpush2.msra.mxu0 0.0
      %569 = vmatprep.subr.mxu0 0.0
      %570 = vmatpush2.msra.mxu0 0.0
      %571 = vmatprep.subr.mxu0 0.0
      %572 = vmatpush2.msra.mxu0 0.0
      %573 = vmatprep.subr.mxu0 0.0
      %574 = vmatpush2.msra.mxu0 0.0
      %575 = vmatprep.subr.mxu0 0.0
      %576 = vmatpush2.msra.mxu0 0.0
      %577 = vmatprep.subr.mxu0 0.0
      %578 = vmatpush2.msra.mxu0 0.0
      %579 = vmatprep.subr.mxu0 0.0
      %580 = vmatpush2.msra.mxu0 0.0
      %581 = vmatprep.mubr.f32.mxu0 0.0
      %582 = vmatmul.mubr.f32.gmra.mxu0 %v344
      %v583 = vpop.f32.mrf.mxu0
      %v584 = vadd.f32 %v330, %v583
      %v585 = vpop.f32.mrf.mxu0
      %v586 = vadd.f32 %v330, %v585
      %587 = vmatprep.mubr.f32.mxu0 0.0
      %588 = vmatmul.mubr.f32.gmra.mxu0 %v347
      %v589 = vpop.f32.mrf.mxu0
      %v590 = vadd.f32 %v335, %v589
      %v591 = vpop.f32.mrf.mxu0
      %v592 = vadd.f32 %v335, %v591
      %593 = vmatprep.mubr.f32.mxu0 0.0
      %594 = vmatmul.mubr.f32.gmra.mxu0 %v350
      %v595 = vpop.f32.mrf.mxu0
      %v596 = vadd.f32 %v340, %v595
      %v597 = vpop.f32.mrf.mxu0
      %v598 = vadd.f32 %v340, %v597
      %599 = vdwg.mxu0
      %vm600 = vcmp.gt.f32.partialorder %v584, 0.0
      %vm601 = vcmp.gt.f32.partialorder %v586, 0.0
      %vm602 = vcmp.gt.f32.partialorder %v590, 0.0
      %vm603 = vcmp.gt.f32.partialorder %v592, 0.0
      %vm604 = vcmp.gt.f32.partialorder %v596, 0.0
      %vm605 = vcmp.gt.f32.partialorder %v598, 0.0
      %v606 = vmul.f32 %v584, 0.01
      %v607 = vmul.f32 %v586, 0.01
      %v608 = vmul.f32 %v590, 0.01
      %v609 = vmul.f32 %v592, 0.01
      %v610 = vmul.f32 %v596, 0.01
      %v611 = vmul.f32 %v598, 0.01
      %v612 = vsel %vm600, %v584, %v606
      %v613 = vsel %vm601, %v586, %v607
      %v614 = vsel %vm602, %v590, %v608
      %v615 = vsel %vm603, %v592, %v609
      %v616 = vsel %vm604, %v596, %v610
      %v617 = vsel %vm605, %v598, %v611
      %v618 = vadd.f32 %v612, %v614
      %v619 = vsel %vm454, %v616, 0.0
      %v620 = vadd.f32 %v618, %v619
      %v621 = vrot.slane %v620, 4
      %v622 = vadd.f32 %v620, %v621
      %v623 = vrot.slane %v622, 2
      %v624 = vadd.f32 %v622, %v623
      %v625 = vrot.slane %v624, 1
      %v626 = vadd.f32 %v624, %v625
      %v627 = vadd.f32 %v613, %v615
      %v628 = vsel %vm454, %v617, 0.0
      %v629 = vadd.f32 %v627, %v628
      %v630 = vrot.slane %v629, 4
      %v631 = vadd.f32 %v629, %v630
      %v632 = vrot.slane %v631, 2
      %v633 = vadd.f32 %v631, %v632
      %v634 = vrot.slane %v633, 1
      %v635 = vadd.f32 %v633, %v634
      %v636 = vmul.f32 %v626, %v472
      %v637 = vmul.f32 %v635, %v472
      %v638 = vsub.f32 %v612, %v636
      %v639 = vsub.f32 %v613, %v637
      %v640 = vsub.f32 %v614, %v636
      %v641 = vsub.f32 %v615, %v637
      %v642 = vsub.f32 %v616, %v636
      %v643 = vsub.f32 %v617, %v637
      %v644 = vmul.f32 %v638, %v638
      %v645 = vmul.f32 %v639, %v639
      %v646 = vmul.f32 %v640, %v640
      %v647 = vmul.f32 %v641, %v641
      %v648 = vmul.f32 %v642, %v642
      %v649 = vmul.f32 %v643, %v643
      %v650 = vadd.f32 %v644, %v646
      %v651 = vsel %vm454, %v648, 0.0
      %v652 = vadd.f32 %v650, %v651
      %v653 = vrot.slane %v652, 4
      %v654 = vadd.f32 %v652, %v653
      %v655 = vrot.slane %v654, 2
      %v656 = vadd.f32 %v654, %v655
      %v657 = vrot.slane %v656, 1
      %v658 = vadd.f32 %v656, %v657
      %v659 = vadd.f32 %v645, %v647
      %v660 = vsel %vm454, %v649, 0.0
      %v661 = vadd.f32 %v659, %v660
      %v662 = vrot.slane %v661, 4
      %v663 = vadd.f32 %v661, %v662
      %v664 = vrot.slane %v663, 2
      %v665 = vadd.f32 %v663, %v664
      %v666 = vrot.slane %v665, 1
      %v667 = vadd.f32 %v665, %v666
      %v668 = vmul.f32 %v658, %v472
      %v669 = vmul.f32 %v667, %v472
      %v670 = vadd.f32 %v668, 1e-05
      %v671 = vadd.f32 %v669, 1e-05
      %v672 = vrsqrt.pop %v670
      %v673 = vrsqrt.pop %v671
      %v674 = vmul.f32 %v638, %v672
      %v675 = vmul.f32 %v639, %v673
      %v676 = vmul.f32 %v640, %v672
      %v677 = vmul.f32 %v641, %v673
      %v678 = vmul.f32 %v642, %v672
      %v679 = vmul.f32 %v643, %v673
      %680 = vset.pattern.permute.xlu0 1
      %681 = vperm.xlu0 %680, %v243
      %v682 = vpop.permute.xlu0 %681
      %684 = vset.pattern.permute.xlu0 1
      %685 = vperm.xlu0 %684, %v244
      %v686 = vpop.permute.xlu0 %685
      %688 = vset.pattern.permute.xlu0 1
      %689 = vperm.xlu0 %688, %v245
      %v690 = vpop.permute.xlu0 %689
      %vm692 = vcmask 162816
      %v694 = vsel %vm692, %v231, 0
      %v697 = vsel %vm692, %v232, 0
      %v700 = vsel %vm692, %v233, 0
      %v703 = vsel %vm454, %v515, 0
      %v706 = vsel %vm454, %v516, 0
      %708 = vmatprep.subr.mxu0 0.0
      %709 = vmatpush1.msra.mxu0 0.0
      %710 = vmatprep.subr.mxu0 0.0
      %711 = vmatpush1.msra.mxu0 0.0
      %712 = vmatprep.subr.mxu0 0.0
      %713 = vmatpush1.msra.mxu0 0.0
      %714 = vmatprep.subr.mxu0 0.0
      %715 = vmatpush1.msra.mxu0 0.0
      %716 = vmatprep.subr.mxu0 0.0
      %717 = vmatpush1.msra.mxu0 0.0
      %718 = vmatprep.subr.mxu0 0.0
      %719 = vmatpush1.msra.mxu0 0.0
      %720 = vmatprep.subr.mxu0 0.0
      %721 = vmatpush1.msra.mxu0 0.0
      %722 = vmatprep.subr.mxu0 0.0
      %723 = vmatpush1.msra.mxu0 0.0
      %724 = vmatprep.subr.mxu0 0.0
      %725 = vmatpush1.msra.mxu0 0.0
      %726 = vmatprep.subr.mxu0 0.0
      %727 = vmatpush1.msra.mxu0 0.0
      %728 = vmatprep.subr.mxu0 0.0
      %729 = vmatpush1.msra.mxu0 0.0
      %730 = vmatprep.subr.mxu0 0.0
      %731 = vmatpush1.msra.mxu0 0.0
      %732 = vmatprep.subr.mxu0 0.0
      %733 = vmatpush1.msra.mxu0 0.0
      %734 = vmatprep.subr.mxu0 %v706
      %735 = vmatpush1.msra.mxu0 %v703
      %736 = vmatprep.subr.mxu0 %v514
      %737 = vmatpush1.msra.mxu0 %v513
      %738 = vmatprep.subr.mxu0 %v512
      %739 = vmatpush1.msra.mxu0 %v511
      %740 = vmatprep.subr.mxu0 0.0
      %741 = vmatpush2.msra.mxu0 0.0
      %742 = vmatprep.subr.mxu0 0.0
      %743 = vmatpush2.msra.mxu0 0.0
      %744 = vmatprep.subr.mxu0 0.0
      %745 = vmatpush2.msra.mxu0 0.0
      %746 = vmatprep.subr.mxu0 0.0
      %747 = vmatpush2.msra.mxu0 0.0
      %748 = vmatprep.subr.mxu0 0.0
      %749 = vmatpush2.msra.mxu0 0.0
      %750 = vmatprep.subr.mxu0 0.0
      %751 = vmatpush2.msra.mxu0 0.0
      %752 = vmatprep.subr.mxu0 0.0
      %753 = vmatpush2.msra.mxu0 0.0
      %754 = vmatprep.subr.mxu0 0.0
      %755 = vmatpush2.msra.mxu0 0.0
      %756 = vmatprep.subr.mxu0 0.0
      %757 = vmatpush2.msra.mxu0 0.0
      %758 = vmatprep.subr.mxu0 0.0
      %759 = vmatpush2.msra.mxu0 0.0
      %760 = vmatprep.subr.mxu0 0.0
      %761 = vmatpush2.msra.mxu0 0.0
      %762 = vmatprep.subr.mxu0 0.0
      %763 = vmatpush2.msra.mxu0 0.0
      %764 = vmatprep.subr.mxu0 0.0
      %765 = vmatpush2.msra.mxu0 0.0
      %766 = vmatprep.subr.mxu0 0.0
      %767 = vmatpush2.msra.mxu0 0.0
      %768 = vmatprep.subr.mxu0 0.0
      %769 = vmatpush2.msra.mxu0 0.0
      %770 = vmatprep.subr.mxu0 0.0
      %771 = vmatpush2.msra.mxu0 0.0
      %772 = vmatprep.mubr.f32.mxu0 0.0
      %773 = vmatmul.mubr.f32.gmra.mxu0 %v694
      %v774 = vpop.f32.mrf.mxu0
      %v775 = vadd.f32 %v682, %v774
      %v776 = vpop.f32.mrf.mxu0
      %v777 = vadd.f32 %v682, %v776
      %778 = vmatprep.mubr.f32.mxu0 0.0
      %779 = vmatmul.mubr.f32.gmra.mxu0 %v697
      %v780 = vpop.f32.mrf.mxu0
      %v781 = vadd.f32 %v686, %v780
      %v782 = vpop.f32.mrf.mxu0
      %v783 = vadd.f32 %v686, %v782
      %784 = vmatprep.mubr.f32.mxu0 0.0
      %785 = vmatmul.mubr.f32.gmra.mxu0 %v700
      %v786 = vpop.f32.mrf.mxu0
      %v787 = vadd.f32 %v690, %v786
      %v788 = vpop.f32.mrf.mxu0
      %v789 = vadd.f32 %v690, %v788
      %790 = vdwg.mxu0
      %vm791 = vcmp.gt.f32.partialorder %v775, 0.0
      %vm792 = vcmp.gt.f32.partialorder %v777, 0.0
      %vm793 = vcmp.gt.f32.partialorder %v781, 0.0
      %vm794 = vcmp.gt.f32.partialorder %v783, 0.0
      %vm795 = vcmp.gt.f32.partialorder %v787, 0.0
      %vm796 = vcmp.gt.f32.partialorder %v789, 0.0
      %v797 = vmul.f32 %v775, 0.01
      %v798 = vmul.f32 %v777, 0.01
      %v799 = vmul.f32 %v781, 0.01
      %v800 = vmul.f32 %v783, 0.01
      %v801 = vmul.f32 %v787, 0.01
      %v802 = vmul.f32 %v789, 0.01
      %v803 = vsel %vm791, %v775, %v797
      %v804 = vsel %vm792, %v777, %v798
      %v805 = vsel %vm793, %v781, %v799
      %v806 = vsel %vm794, %v783, %v800
      %v807 = vsel %vm795, %v787, %v801
      %v808 = vsel %vm796, %v789, %v802
      %v809 = vadd.f32 %v803, %v805
      %v810 = vsel %vm454, %v807, 0.0
      %v811 = vadd.f32 %v809, %v810
      %v812 = vrot.slane %v811, 4
      %v813 = vadd.f32 %v811, %v812
      %v814 = vrot.slane %v813, 2
      %v815 = vadd.f32 %v813, %v814
      %v816 = vrot.slane %v815, 1
      %v817 = vadd.f32 %v815, %v816
      %v818 = vadd.f32 %v804, %v806
      %v819 = vsel %vm454, %v808, 0.0
      %v820 = vadd.f32 %v818, %v819
      %v821 = vrot.slane %v820, 4
      %v822 = vadd.f32 %v820, %v821
      %v823 = vrot.slane %v822, 2
      %v824 = vadd.f32 %v822, %v823
      %v825 = vrot.slane %v824, 1
      %v826 = vadd.f32 %v824, %v825
      %v827 = vmul.f32 %v817, %v472
      %v828 = vmul.f32 %v826, %v472
      %v829 = vsub.f32 %v803, %v827
      %v830 = vsub.f32 %v804, %v828
      %v831 = vsub.f32 %v805, %v827
      %v832 = vsub.f32 %v806, %v828
      %v833 = vsub.f32 %v807, %v827
      %v834 = vsub.f32 %v808, %v828
      %v835 = vmul.f32 %v829, %v829
      %v836 = vmul.f32 %v830, %v830
      %v837 = vmul.f32 %v831, %v831
      %v838 = vmul.f32 %v832, %v832
      %v839 = vmul.f32 %v833, %v833
      %v840 = vmul.f32 %v834, %v834
      %v841 = vadd.f32 %v835, %v837
      %v842 = vsel %vm454, %v839, 0.0
      %v843 = vadd.f32 %v841, %v842
      %v844 = vrot.slane %v843, 4
      %v845 = vadd.f32 %v843, %v844
      %v846 = vrot.slane %v845, 2
      %v847 = vadd.f32 %v845, %v846
      %v848 = vrot.slane %v847, 1
      %v849 = vadd.f32 %v847, %v848
      %v850 = vadd.f32 %v836, %v838
      %v851 = vsel %vm454, %v840, 0.0
      %v852 = vadd.f32 %v850, %v851
      %v853 = vrot.slane %v852, 4
      %v854 = vadd.f32 %v852, %v853
      %v855 = vrot.slane %v854, 2
      %v856 = vadd.f32 %v854, %v855
      %v857 = vrot.slane %v856, 1
      %v858 = vadd.f32 %v856, %v857
      %v859 = vmul.f32 %v849, %v472
      %v860 = vmul.f32 %v858, %v472
      %v861 = vadd.f32 %v859, 1e-05
      %v862 = vadd.f32 %v860, 1e-05
      %v863 = vrsqrt.pop %v861
      %v864 = vrsqrt.pop %v862
      %v865 = vmul.f32 %v829, %v863
      %v866 = vmul.f32 %v830, %v864
      %v867 = vmul.f32 %v831, %v863
      %v868 = vmul.f32 %v832, %v864
      %v869 = vmul.f32 %v833, %v863
      %v870 = vmul.f32 %v834, %v864
      %v872 = vsel %vm454, %v678, 0
      %v875 = vsel %vm454, %v679, 0
      %877 = vmatprep.subr.mxu0 0.0
      %878 = vmatpush1.msra.mxu0 0.0
      %879 = vmatprep.subr.mxu0 0.0
      %880 = vmatpush1.msra.mxu0 0.0
      %881 = vmatprep.subr.mxu0 0.0
      %882 = vmatpush1.msra.mxu0 0.0
      %883 = vmatprep.subr.mxu0 0.0
      %884 = vmatpush1.msra.mxu0 0.0
      %885 = vmatprep.subr.mxu0 0.0
      %886 = vmatpush1.msra.mxu0 0.0
      %887 = vmatprep.subr.mxu0 0.0
      %888 = vmatpush1.msra.mxu0 0.0
      %889 = vmatprep.subr.mxu0 0.0
      %890 = vmatpush1.msra.mxu0 0.0
      %891 = vmatprep.subr.mxu0 0.0
      %892 = vmatpush1.msra.mxu0 0.0
      %893 = vmatprep.subr.mxu0 0.0
      %894 = vmatpush1.msra.mxu0 0.0
      %895 = vmatprep.subr.mxu0 0.0
      %896 = vmatpush1.msra.mxu0 0.0
      %897 = vmatprep.subr.mxu0 0.0
      %898 = vmatpush1.msra.mxu0 0.0
      %899 = vmatprep.subr.mxu0 0.0
      %900 = vmatpush1.msra.mxu0 0.0
      %901 = vmatprep.subr.mxu0 0.0
      %902 = vmatpush1.msra.mxu0 0.0
      %903 = vmatprep.subr.mxu0 %v875
      %904 = vmatpush1.msra.mxu0 %v872
      %905 = vmatprep.subr.mxu0 %v677
      %906 = vmatpush1.msra.mxu0 %v676
      %907 = vmatprep.subr.mxu0 %v675
      %908 = vmatpush1.msra.mxu0 %v674
      %909 = vmatprep.subr.mxu0 0.0
      %910 = vmatpush2.msra.mxu0 0.0
      %911 = vmatprep.subr.mxu0 0.0
      %912 = vmatpush2.msra.mxu0 0.0
      %913 = vmatprep.subr.mxu0 0.0
      %914 = vmatpush2.msra.mxu0 0.0
      %915 = vmatprep.subr.mxu0 0.0
      %916 = vmatpush2.msra.mxu0 0.0
      %917 = vmatprep.subr.mxu0 0.0
      %918 = vmatpush2.msra.mxu0 0.0
      %919 = vmatprep.subr.mxu0 0.0
      %920 = vmatpush2.msra.mxu0 0.0
      %921 = vmatprep.subr.mxu0 0.0
      %922 = vmatpush2.msra.mxu0 0.0
      %923 = vmatprep.subr.mxu0 0.0
      %924 = vmatpush2.msra.mxu0 0.0
      %925 = vmatprep.subr.mxu0 0.0
      %926 = vmatpush2.msra.mxu0 0.0
      %927 = vmatprep.subr.mxu0 0.0
      %928 = vmatpush2.msra.mxu0 0.0
      %929 = vmatprep.subr.mxu0 0.0
      %930 = vmatpush2.msra.mxu0 0.0
      %931 = vmatprep.subr.mxu0 0.0
      %932 = vmatpush2.msra.mxu0 0.0
      %933 = vmatprep.subr.mxu0 0.0
      %934 = vmatpush2.msra.mxu0 0.0
      %935 = vmatprep.subr.mxu0 0.0
      %936 = vmatpush2.msra.mxu0 0.0
      %937 = vmatprep.subr.mxu0 0.0
      %938 = vmatpush2.msra.mxu0 0.0
      %939 = vmatprep.subr.mxu0 0.0
      %940 = vmatpush2.msra.mxu0 0.0
      %941 = vmatprep.mubr.f32.mxu0 0.0
      %942 = vmatmul.mubr.f32.gmra.mxu0 %v694
      %v943 = vpop.f32.mrf.mxu0
      %v944 = vadd.f32 %v682, %v943
      %v945 = vpop.f32.mrf.mxu0
      %v946 = vadd.f32 %v682, %v945
      %947 = vmatprep.mubr.f32.mxu0 0.0
      %948 = vmatmul.mubr.f32.gmra.mxu0 %v697
      %v949 = vpop.f32.mrf.mxu0
      %v950 = vadd.f32 %v686, %v949
      %v951 = vpop.f32.mrf.mxu0
      %v952 = vadd.f32 %v686, %v951
      %953 = vmatprep.mubr.f32.mxu0 0.0
      %954 = vmatmul.mubr.f32.gmra.mxu0 %v700
      %v955 = vpop.f32.mrf.mxu0
      %v956 = vadd.f32 %v690, %v955
      %v957 = vpop.f32.mrf.mxu0
      %v958 = vadd.f32 %v690, %v957
      %959 = vdwg.mxu0
      %vm960 = vcmp.gt.f32.partialorder %v944, 0.0
      %vm961 = vcmp.gt.f32.partialorder %v946, 0.0
      %vm962 = vcmp.gt.f32.partialorder %v950, 0.0
      %vm963 = vcmp.gt.f32.partialorder %v952, 0.0
      %vm964 = vcmp.gt.f32.partialorder %v956, 0.0
      %vm965 = vcmp.gt.f32.partialorder %v958, 0.0
      %v966 = vmul.f32 %v944, 0.01
      %v967 = vmul.f32 %v946, 0.01
      %v968 = vmul.f32 %v950, 0.01
      %v969 = vmul.f32 %v952, 0.01
      %v970 = vmul.f32 %v956, 0.01
      %v971 = vmul.f32 %v958, 0.01
      %v972 = vsel %vm960, %v944, %v966
      %v973 = vsel %vm961, %v946, %v967
      %v974 = vsel %vm962, %v950, %v968
      %v975 = vsel %vm963, %v952, %v969
      %v976 = vsel %vm964, %v956, %v970
      %v977 = vsel %vm965, %v958, %v971
      %v978 = vadd.f32 %v972, %v974
      %v979 = vsel %vm454, %v976, 0.0
      %v980 = vadd.f32 %v978, %v979
      %v981 = vrot.slane %v980, 4
      %v982 = vadd.f32 %v980, %v981
      %v983 = vrot.slane %v982, 2
      %v984 = vadd.f32 %v982, %v983
      %v985 = vrot.slane %v984, 1
      %v986 = vadd.f32 %v984, %v985
      %v987 = vadd.f32 %v973, %v975
      %v988 = vsel %vm454, %v977, 0.0
      %v989 = vadd.f32 %v987, %v988
      %v990 = vrot.slane %v989, 4
      %v991 = vadd.f32 %v989, %v990
      %v992 = vrot.slane %v991, 2
      %v993 = vadd.f32 %v991, %v992
      %v994 = vrot.slane %v993, 1
      %v995 = vadd.f32 %v993, %v994
      %v996 = vmul.f32 %v986, %v472
      %v997 = vmul.f32 %v995, %v472
      %v998 = vsub.f32 %v972, %v996
      %v999 = vsub.f32 %v973, %v997
      %v1000 = vsub.f32 %v974, %v996
      %v1001 = vsub.f32 %v975, %v997
      %v1002 = vsub.f32 %v976, %v996
      %v1003 = vsub.f32 %v977, %v997
      %v1004 = vmul.f32 %v998, %v998
      %v1005 = vmul.f32 %v999, %v999
      %v1006 = vmul.f32 %v1000, %v1000
      %v1007 = vmul.f32 %v1001, %v1001
      %v1008 = vmul.f32 %v1002, %v1002
      %v1009 = vmul.f32 %v1003, %v1003
      %v1010 = vadd.f32 %v1004, %v1006
      %v1011 = vsel %vm454, %v1008, 0.0
      %v1012 = vadd.f32 %v1010, %v1011
      %v1013 = vrot.slane %v1012, 4
      %v1014 = vadd.f32 %v1012, %v1013
      %v1015 = vrot.slane %v1014, 2
      %v1016 = vadd.f32 %v1014, %v1015
      %v1017 = vrot.slane %v1016, 1
      %v1018 = vadd.f32 %v1016, %v1017
      %v1019 = vadd.f32 %v1005, %v1007
      %v1020 = vsel %vm454, %v1009, 0.0
      %v1021 = vadd.f32 %v1019, %v1020
      %v1022 = vrot.slane %v1021, 4
      %v1023 = vadd.f32 %v1021, %v1022
      %v1024 = vrot.slane %v1023, 2
      %v1025 = vadd.f32 %v1023, %v1024
      %v1026 = vrot.slane %v1025, 1
      %v1027 = vadd.f32 %v1025, %v1026
      %v1028 = vmul.f32 %v1018, %v472
      %v1029 = vmul.f32 %v1027, %v472
      %v1030 = vadd.f32 %v1028, 1e-05
      %v1031 = vadd.f32 %v1029, 1e-05
      %v1032 = vrsqrt.pop %v1030
      %v1033 = vrsqrt.pop %v1031
      %v1034 = vmul.f32 %v998, %v1032
      %v1035 = vmul.f32 %v999, %v1033
      %v1036 = vmul.f32 %v1000, %v1032
      %v1037 = vmul.f32 %v1001, %v1033
      %v1038 = vmul.f32 %v1002, %v1032
      %v1039 = vmul.f32 %v1003, %v1033
      %1040 = vset.pattern.permute.xlu0 2
      %1041 = vperm.xlu0 %1040, %v243
      %v1042 = vpop.permute.xlu0 %1041
      %1044 = vset.pattern.permute.xlu0 2
      %1045 = vperm.xlu0 %1044, %v244
      %v1046 = vpop.permute.xlu0 %1045
      %1048 = vset.pattern.permute.xlu0 2
      %1049 = vperm.xlu0 %1048, %v245
      %v1050 = vpop.permute.xlu0 %1049
      %v1053 = vsel %vm692, %v235, 0
      %v1056 = vsel %vm692, %v236, 0
      %v1059 = vsel %vm692, %v237, 0
      %v1062 = vsel %vm454, %v869, 0
      %v1065 = vsel %vm454, %v870, 0
      %1067 = vmatprep.subr.mxu0 0.0
      %1068 = vmatpush1.msra.mxu0 0.0
      %1069 = vmatprep.subr.mxu0 0.0
      %1070 = vmatpush1.msra.mxu0 0.0
      %1071 = vmatprep.subr.mxu0 0.0
      %1072 = vmatpush1.msra.mxu0 0.0
      %1073 = vmatprep.subr.mxu0 0.0
      %1074 = vmatpush1.msra.mxu0 0.0
      %1075 = vmatprep.subr.mxu0 0.0
      %1076 = vmatpush1.msra.mxu0 0.0
      %1077 = vmatprep.subr.mxu0 0.0
      %1078 = vmatpush1.msra.mxu0 0.0
      %1079 = vmatprep.subr.mxu0 0.0
      %1080 = vmatpush1.msra.mxu0 0.0
      %1081 = vmatprep.subr.mxu0 0.0
      %1082 = vmatpush1.msra.mxu0 0.0
      %1083 = vmatprep.subr.mxu0 0.0
      %1084 = vmatpush1.msra.mxu0 0.0
      %1085 = vmatprep.subr.mxu0 0.0
      %1086 = vmatpush1.msra.mxu0 0.0
      %1087 = vmatprep.subr.mxu0 0.0
      %1088 = vmatpush1.msra.mxu0 0.0
      %1089 = vmatprep.subr.mxu0 0.0
      %1090 = vmatpush1.msra.mxu0 0.0
      %1091 = vmatprep.subr.mxu0 0.0
      %1092 = vmatpush1.msra.mxu0 0.0
      %1093 = vmatprep.subr.mxu0 %v1065
      %1094 = vmatpush1.msra.mxu0 %v1062
      %1095 = vmatprep.subr.mxu0 %v868
      %1096 = vmatpush1.msra.mxu0 %v867
      %1097 = vmatprep.subr.mxu0 %v866
      %1098 = vmatpush1.msra.mxu0 %v865
      %1099 = vmatprep.subr.mxu0 0.0
      %1100 = vmatpush2.msra.mxu0 0.0
      %1101 = vmatprep.subr.mxu0 0.0
      %1102 = vmatpush2.msra.mxu0 0.0
      %1103 = vmatprep.subr.mxu0 0.0
      %1104 = vmatpush2.msra.mxu0 0.0
      %1105 = vmatprep.subr.mxu0 0.0
      %1106 = vmatpush2.msra.mxu0 0.0
      %1107 = vmatprep.subr.mxu0 0.0
      %1108 = vmatpush2.msra.mxu0 0.0
      %1109 = vmatprep.subr.mxu0 0.0
      %1110 = vmatpush2.msra.mxu0 0.0
      %1111 = vmatprep.subr.mxu0 0.0
      %1112 = vmatpush2.msra.mxu0 0.0
      %1113 = vmatprep.subr.mxu0 0.0
      %1114 = vmatpush2.msra.mxu0 0.0
      %1115 = vmatprep.subr.mxu0 0.0
      %1116 = vmatpush2.msra.mxu0 0.0
      %1117 = vmatprep.subr.mxu0 0.0
      %1118 = vmatpush2.msra.mxu0 0.0
      %1119 = vmatprep.subr.mxu0 0.0
      %1120 = vmatpush2.msra.mxu0 0.0
      %1121 = vmatprep.subr.mxu0 0.0
      %1122 = vmatpush2.msra.mxu0 0.0
      %1123 = vmatprep.subr.mxu0 0.0
      %1124 = vmatpush2.msra.mxu0 0.0
      %1125 = vmatprep.subr.mxu0 0.0
      %1126 = vmatpush2.msra.mxu0 0.0
      %1127 = vmatprep.subr.mxu0 0.0
      %1128 = vmatpush2.msra.mxu0 0.0
      %1129 = vmatprep.subr.mxu0 0.0
      %1130 = vmatpush2.msra.mxu0 0.0
      %1131 = vmatprep.mubr.f32.mxu0 0.0
      %1132 = vmatmul.mubr.f32.gmra.mxu0 %v1053
      %v1133 = vpop.f32.mrf.mxu0
      %v1134 = vadd.f32 %v1042, %v1133
      %v1135 = vpop.f32.mrf.mxu0
      %v1136 = vadd.f32 %v1042, %v1135
      %1137 = vmatprep.mubr.f32.mxu0 0.0
      %1138 = vmatmul.mubr.f32.gmra.mxu0 %v1056
      %v1139 = vpop.f32.mrf.mxu0
      %v1140 = vadd.f32 %v1046, %v1139
      %v1141 = vpop.f32.mrf.mxu0
      %v1142 = vadd.f32 %v1046, %v1141
      %1143 = vmatprep.mubr.f32.mxu0 0.0
      %1144 = vmatmul.mubr.f32.gmra.mxu0 %v1059
      %v1145 = vpop.f32.mrf.mxu0
      %v1146 = vadd.f32 %v1050, %v1145
      %v1147 = vpop.f32.mrf.mxu0
      %v1148 = vadd.f32 %v1050, %v1147
      %1149 = vdwg.mxu0
      %vm1150 = vcmp.gt.f32.partialorder %v1134, 0.0
      %vm1151 = vcmp.gt.f32.partialorder %v1136, 0.0
      %vm1152 = vcmp.gt.f32.partialorder %v1140, 0.0
      %vm1153 = vcmp.gt.f32.partialorder %v1142, 0.0
      %vm1154 = vcmp.gt.f32.partialorder %v1146, 0.0
      %vm1155 = vcmp.gt.f32.partialorder %v1148, 0.0
      %v1156 = vmul.f32 %v1134, 0.01
      %v1157 = vmul.f32 %v1136, 0.01
      %v1158 = vmul.f32 %v1140, 0.01
      %v1159 = vmul.f32 %v1142, 0.01
      %v1160 = vmul.f32 %v1146, 0.01
      %v1161 = vmul.f32 %v1148, 0.01
      %v1162 = vsel %vm1150, %v1134, %v1156
      %v1163 = vsel %vm1151, %v1136, %v1157
      %v1164 = vsel %vm1152, %v1140, %v1158
      %v1165 = vsel %vm1153, %v1142, %v1159
      %v1166 = vsel %vm1154, %v1146, %v1160
      %v1167 = vsel %vm1155, %v1148, %v1161
      %v1168 = vadd.f32 %v1162, %v1164
      %v1169 = vsel %vm454, %v1166, 0.0
      %v1170 = vadd.f32 %v1168, %v1169
      %v1171 = vrot.slane %v1170, 4
      %v1172 = vadd.f32 %v1170, %v1171
      %v1173 = vrot.slane %v1172, 2
      %v1174 = vadd.f32 %v1172, %v1173
      %v1175 = vrot.slane %v1174, 1
      %v1176 = vadd.f32 %v1174, %v1175
      %v1177 = vadd.f32 %v1163, %v1165
      %v1178 = vsel %vm454, %v1167, 0.0
      %v1179 = vadd.f32 %v1177, %v1178
      %v1180 = vrot.slane %v1179, 4
      %v1181 = vadd.f32 %v1179, %v1180
      %v1182 = vrot.slane %v1181, 2
      %v1183 = vadd.f32 %v1181, %v1182
      %v1184 = vrot.slane %v1183, 1
      %v1185 = vadd.f32 %v1183, %v1184
      %v1186 = vmul.f32 %v1176, %v472
      %v1187 = vmul.f32 %v1185, %v472
      %v1188 = vsub.f32 %v1162, %v1186
      %v1189 = vsub.f32 %v1163, %v1187
      %v1190 = vsub.f32 %v1164, %v1186
      %v1191 = vsub.f32 %v1165, %v1187
      %v1192 = vsub.f32 %v1166, %v1186
      %v1193 = vsub.f32 %v1167, %v1187
      %v1194 = vmul.f32 %v1188, %v1188
      %v1195 = vmul.f32 %v1189, %v1189
      %v1196 = vmul.f32 %v1190, %v1190
      %v1197 = vmul.f32 %v1191, %v1191
      %v1198 = vmul.f32 %v1192, %v1192
      %v1199 = vmul.f32 %v1193, %v1193
      %v1200 = vadd.f32 %v1194, %v1196
      %v1201 = vsel %vm454, %v1198, 0.0
      %v1202 = vadd.f32 %v1200, %v1201
      %v1203 = vrot.slane %v1202, 4
      %v1204 = vadd.f32 %v1202, %v1203
      %v1205 = vrot.slane %v1204, 2
      %v1206 = vadd.f32 %v1204, %v1205
      %v1207 = vrot.slane %v1206, 1
      %v1208 = vadd.f32 %v1206, %v1207
      %v1209 = vadd.f32 %v1195, %v1197
      %v1210 = vsel %vm454, %v1199, 0.0
      %v1211 = vadd.f32 %v1209, %v1210
      %v1212 = vrot.slane %v1211, 4
      %v1213 = vadd.f32 %v1211, %v1212
      %v1214 = vrot.slane %v1213, 2
      %v1215 = vadd.f32 %v1213, %v1214
      %v1216 = vrot.slane %v1215, 1
      %v1217 = vadd.f32 %v1215, %v1216
      %v1218 = vmul.f32 %v1208, %v472
      %v1219 = vmul.f32 %v1217, %v472
      %v1220 = vadd.f32 %v1218, 1e-05
      %v1221 = vadd.f32 %v1219, 1e-05
      %v1222 = vrsqrt.pop %v1220
      %v1223 = vrsqrt.pop %v1221
      %v1224 = vmul.f32 %v1188, %v1222
      %v1225 = vmul.f32 %v1189, %v1223
      %v1226 = vmul.f32 %v1190, %v1222
      %v1227 = vmul.f32 %v1191, %v1223
      %v1228 = vmul.f32 %v1192, %v1222
      %v1229 = vmul.f32 %v1193, %v1223
      %v1231 = vsel %vm454, %v1038, 0
      %v1234 = vsel %vm454, %v1039, 0
      %1236 = vmatprep.subr.mxu0 0.0
      %1237 = vmatpush1.msra.mxu0 0.0
      %1238 = vmatprep.subr.mxu0 0.0
      %1239 = vmatpush1.msra.mxu0 0.0
      %1240 = vmatprep.subr.mxu0 0.0
      %1241 = vmatpush1.msra.mxu0 0.0
      %1242 = vmatprep.subr.mxu0 0.0
      %1243 = vmatpush1.msra.mxu0 0.0
      %1244 = vmatprep.subr.mxu0 0.0
      %1245 = vmatpush1.msra.mxu0 0.0
      %1246 = vmatprep.subr.mxu0 0.0
      %1247 = vmatpush1.msra.mxu0 0.0
      %1248 = vmatprep.subr.mxu0 0.0
      %1249 = vmatpush1.msra.mxu0 0.0
      %1250 = vmatprep.subr.mxu0 0.0
      %1251 = vmatpush1.msra.mxu0 0.0
      %1252 = vmatprep.subr.mxu0 0.0
      %1253 = vmatpush1.msra.mxu0 0.0
      %1254 = vmatprep.subr.mxu0 0.0
      %1255 = vmatpush1.msra.mxu0 0.0
      %1256 = vmatprep.subr.mxu0 0.0
      %1257 = vmatpush1.msra.mxu0 0.0
      %1258 = vmatprep.subr.mxu0 0.0
      %1259 = vmatpush1.msra.mxu0 0.0
      %1260 = vmatprep.subr.mxu0 0.0
      %1261 = vmatpush1.msra.mxu0 0.0
      %1262 = vmatprep.subr.mxu0 %v1234
      %1263 = vmatpush1.msra.mxu0 %v1231
      %1264 = vmatprep.subr.mxu0 %v1037
      %1265 = vmatpush1.msra.mxu0 %v1036
      %1266 = vmatprep.subr.mxu0 %v1035
      %1267 = vmatpush1.msra.mxu0 %v1034
      %1268 = vmatprep.subr.mxu0 0.0
      %1269 = vmatpush2.msra.mxu0 0.0
      %1270 = vmatprep.subr.mxu0 0.0
      %1271 = vmatpush2.msra.mxu0 0.0
      %1272 = vmatprep.subr.mxu0 0.0
      %1273 = vmatpush2.msra.mxu0 0.0
      %1274 = vmatprep.subr.mxu0 0.0
      %1275 = vmatpush2.msra.mxu0 0.0
      %1276 = vmatprep.subr.mxu0 0.0
      %1277 = vmatpush2.msra.mxu0 0.0
      %1278 = vmatprep.subr.mxu0 0.0
      %1279 = vmatpush2.msra.mxu0 0.0
      %1280 = vmatprep.subr.mxu0 0.0
      %1281 = vmatpush2.msra.mxu0 0.0
      %1282 = vmatprep.subr.mxu0 0.0
      %1283 = vmatpush2.msra.mxu0 0.0
      %1284 = vmatprep.subr.mxu0 0.0
      %1285 = vmatpush2.msra.mxu0 0.0
      %1286 = vmatprep.subr.mxu0 0.0
      %1287 = vmatpush2.msra.mxu0 0.0
      %1288 = vmatprep.subr.mxu0 0.0
      %1289 = vmatpush2.msra.mxu0 0.0
      %1290 = vmatprep.subr.mxu0 0.0
      %1291 = vmatpush2.msra.mxu0 0.0
      %1292 = vmatprep.subr.mxu0 0.0
      %1293 = vmatpush2.msra.mxu0 0.0
      %1294 = vmatprep.subr.mxu0 0.0
      %1295 = vmatpush2.msra.mxu0 0.0
      %1296 = vmatprep.subr.mxu0 0.0
      %1297 = vmatpush2.msra.mxu0 0.0
      %1298 = vmatprep.subr.mxu0 0.0
      %1299 = vmatpush2.msra.mxu0 0.0
      %1300 = vmatprep.mubr.f32.mxu0 0.0
      %1301 = vmatmul.mubr.f32.gmra.mxu0 %v1053
      %v1302 = vpop.f32.mrf.mxu0
      %v1303 = vadd.f32 %v1042, %v1302
      %v1304 = vpop.f32.mrf.mxu0
      %v1305 = vadd.f32 %v1042, %v1304
      %1306 = vmatprep.mubr.f32.mxu0 0.0
      %1307 = vmatmul.mubr.f32.gmra.mxu0 %v1056
      %v1308 = vpop.f32.mrf.mxu0
      %v1309 = vadd.f32 %v1046, %v1308
      %v1310 = vpop.f32.mrf.mxu0
      %v1311 = vadd.f32 %v1046, %v1310
      %1312 = vmatprep.mubr.f32.mxu0 0.0
      %1313 = vmatmul.mubr.f32.gmra.mxu0 %v1059
      %v1314 = vpop.f32.mrf.mxu0
      %v1315 = vadd.f32 %v1050, %v1314
      %v1316 = vpop.f32.mrf.mxu0
      %v1317 = vadd.f32 %v1050, %v1316
      %1318 = vdwg.mxu0
      %vm1319 = vcmp.gt.f32.partialorder %v1303, 0.0
      %vm1320 = vcmp.gt.f32.partialorder %v1305, 0.0
      %vm1321 = vcmp.gt.f32.partialorder %v1309, 0.0
      %vm1322 = vcmp.gt.f32.partialorder %v1311, 0.0
      %vm1323 = vcmp.gt.f32.partialorder %v1315, 0.0
      %vm1324 = vcmp.gt.f32.partialorder %v1317, 0.0
      %v1325 = vmul.f32 %v1303, 0.01
      %v1326 = vmul.f32 %v1305, 0.01
      %v1327 = vmul.f32 %v1309, 0.01
      %v1328 = vmul.f32 %v1311, 0.01
      %v1329 = vmul.f32 %v1315, 0.01
      %v1330 = vmul.f32 %v1317, 0.01
      %v1331 = vsel %vm1319, %v1303, %v1325
      %v1332 = vsel %vm1320, %v1305, %v1326
      %v1333 = vsel %vm1321, %v1309, %v1327
      %v1334 = vsel %vm1322, %v1311, %v1328
      %v1335 = vsel %vm1323, %v1315, %v1329
      %v1336 = vsel %vm1324, %v1317, %v1330
      %v1337 = vadd.f32 %v1331, %v1333
      %v1338 = vsel %vm454, %v1335, 0.0
      %v1339 = vadd.f32 %v1337, %v1338
      %v1340 = vrot.slane %v1339, 4
      %v1341 = vadd.f32 %v1339, %v1340
      %v1342 = vrot.slane %v1341, 2
      %v1343 = vadd.f32 %v1341, %v1342
      %v1344 = vrot.slane %v1343, 1
      %v1345 = vadd.f32 %v1343, %v1344
      %v1346 = vadd.f32 %v1332, %v1334
      %v1347 = vsel %vm454, %v1336, 0.0
      %v1348 = vadd.f32 %v1346, %v1347
      %v1349 = vrot.slane %v1348, 4
      %v1350 = vadd.f32 %v1348, %v1349
      %v1351 = vrot.slane %v1350, 2
      %v1352 = vadd.f32 %v1350, %v1351
      %v1353 = vrot.slane %v1352, 1
      %v1354 = vadd.f32 %v1352, %v1353
      %v1355 = vmul.f32 %v1345, %v472
      %v1356 = vmul.f32 %v1354, %v472
      %v1357 = vsub.f32 %v1331, %v1355
      %v1358 = vsub.f32 %v1332, %v1356
      %v1359 = vsub.f32 %v1333, %v1355
      %v1360 = vsub.f32 %v1334, %v1356
      %v1361 = vsub.f32 %v1335, %v1355
      %v1362 = vsub.f32 %v1336, %v1356
      %v1363 = vmul.f32 %v1357, %v1357
      %v1364 = vmul.f32 %v1358, %v1358
      %v1365 = vmul.f32 %v1359, %v1359
      %v1366 = vmul.f32 %v1360, %v1360
      %v1367 = vmul.f32 %v1361, %v1361
      %v1368 = vmul.f32 %v1362, %v1362
      %v1369 = vadd.f32 %v1363, %v1365
      %v1370 = vsel %vm454, %v1367, 0.0
      %v1371 = vadd.f32 %v1369, %v1370
      %v1372 = vrot.slane %v1371, 4
      %v1373 = vadd.f32 %v1371, %v1372
      %v1374 = vrot.slane %v1373, 2
      %v1375 = vadd.f32 %v1373, %v1374
      %v1376 = vrot.slane %v1375, 1
      %v1377 = vadd.f32 %v1375, %v1376
      %v1378 = vadd.f32 %v1364, %v1366
      %v1379 = vsel %vm454, %v1368, 0.0
      %v1380 = vadd.f32 %v1378, %v1379
      %v1381 = vrot.slane %v1380, 4
      %v1382 = vadd.f32 %v1380, %v1381
      %v1383 = vrot.slane %v1382, 2
      %v1384 = vadd.f32 %v1382, %v1383
      %v1385 = vrot.slane %v1384, 1
      %v1386 = vadd.f32 %v1384, %v1385
      %v1387 = vmul.f32 %v1377, %v472
      %v1388 = vmul.f32 %v1386, %v472
      %v1389 = vadd.f32 %v1387, 1e-05
      %v1390 = vadd.f32 %v1388, 1e-05
      %v1391 = vrsqrt.pop %v1389
      %v1392 = vrsqrt.pop %v1390
      %v1393 = vmul.f32 %v1357, %v1391
      %v1394 = vmul.f32 %v1358, %v1392
      %v1395 = vmul.f32 %v1359, %v1391
      %v1396 = vmul.f32 %v1360, %v1392
      %v1397 = vmul.f32 %v1361, %v1391
      %v1398 = vmul.f32 %v1362, %v1392
      %1399 = vset.pattern.permute.xlu0 3
      %1400 = vperm.xlu0 %1399, %v243
      %v1401 = vpop.permute.xlu0 %1400
      %1403 = vset.pattern.permute.xlu0 3
      %1404 = vperm.xlu0 %1403, %v244
      %v1405 = vpop.permute.xlu0 %1404
      %1407 = vset.pattern.permute.xlu0 3
      %1408 = vperm.xlu0 %1407, %v245
      %v1409 = vpop.permute.xlu0 %1408
      %v1412 = vsel %vm692, %v239, 0
      %v1415 = vsel %vm692, %v240, 0
      %v1418 = vsel %vm692, %v241, 0
      %v1421 = vsel %vm454, %v1228, 0
      %v1424 = vsel %vm454, %v1229, 0
      %1426 = vmatprep.subr.mxu0 0.0
      %1427 = vmatpush1.msra.mxu0 0.0
      %1428 = vmatprep.subr.mxu0 0.0
      %1429 = vmatpush1.msra.mxu0 0.0
      %1430 = vmatprep.subr.mxu0 0.0
      %1431 = vmatpush1.msra.mxu0 0.0
      %1432 = vmatprep.subr.mxu0 0.0
      %1433 = vmatpush1.msra.mxu0 0.0
      %1434 = vmatprep.subr.mxu0 0.0
      %1435 = vmatpush1.msra.mxu0 0.0
      %1436 = vmatprep.subr.mxu0 0.0
      %1437 = vmatpush1.msra.mxu0 0.0
      %1438 = vmatprep.subr.mxu0 0.0
      %1439 = vmatpush1.msra.mxu0 0.0
      %1440 = vmatprep.subr.mxu0 0.0
      %1441 = vmatpush1.msra.mxu0 0.0
      %1442 = vmatprep.subr.mxu0 0.0
      %1443 = vmatpush1.msra.mxu0 0.0
      %1444 = vmatprep.subr.mxu0 0.0
      %1445 = vmatpush1.msra.mxu0 0.0
      %1446 = vmatprep.subr.mxu0 0.0
      %1447 = vmatpush1.msra.mxu0 0.0
      %1448 = vmatprep.subr.mxu0 0.0
      %1449 = vmatpush1.msra.mxu0 0.0
      %1450 = vmatprep.subr.mxu0 0.0
      %1451 = vmatpush1.msra.mxu0 0.0
      %1452 = vmatprep.subr.mxu0 %v1424
      %1453 = vmatpush1.msra.mxu0 %v1421
      %1454 = vmatprep.subr.mxu0 %v1227
      %1455 = vmatpush1.msra.mxu0 %v1226
      %1456 = vmatprep.subr.mxu0 %v1225
      %1457 = vmatpush1.msra.mxu0 %v1224
      %1458 = vmatprep.subr.mxu0 0.0
      %1459 = vmatpush2.msra.mxu0 0.0
      %1460 = vmatprep.subr.mxu0 0.0
      %1461 = vmatpush2.msra.mxu0 0.0
      %1462 = vmatprep.subr.mxu0 0.0
      %1463 = vmatpush2.msra.mxu0 0.0
      %1464 = vmatprep.subr.mxu0 0.0
      %1465 = vmatpush2.msra.mxu0 0.0
      %1466 = vmatprep.subr.mxu0 0.0
      %1467 = vmatpush2.msra.mxu0 0.0
      %1468 = vmatprep.subr.mxu0 0.0
      %1469 = vmatpush2.msra.mxu0 0.0
      %1470 = vmatprep.subr.mxu0 0.0
      %1471 = vmatpush2.msra.mxu0 0.0
      %1472 = vmatprep.subr.mxu0 0.0
      %1473 = vmatpush2.msra.mxu0 0.0
      %1474 = vmatprep.subr.mxu0 0.0
      %1475 = vmatpush2.msra.mxu0 0.0
      %1476 = vmatprep.subr.mxu0 0.0
      %1477 = vmatpush2.msra.mxu0 0.0
      %1478 = vmatprep.subr.mxu0 0.0
      %1479 = vmatpush2.msra.mxu0 0.0
      %1480 = vmatprep.subr.mxu0 0.0
      %1481 = vmatpush2.msra.mxu0 0.0
      %1482 = vmatprep.subr.mxu0 0.0
      %1483 = vmatpush2.msra.mxu0 0.0
      %1484 = vmatprep.subr.mxu0 0.0
      %1485 = vmatpush2.msra.mxu0 0.0
      %1486 = vmatprep.subr.mxu0 0.0
      %1487 = vmatpush2.msra.mxu0 0.0
      %1488 = vmatprep.subr.mxu0 0.0
      %1489 = vmatpush2.msra.mxu0 0.0
      %1490 = vmatprep.mubr.f32.mxu0 0.0
      %1491 = vmatmul.mubr.f32.gmra.mxu0 %v1412
      %v1492 = vpop.f32.mrf.mxu0
      %v1493 = vadd.f32 %v1401, %v1492
      %v1494 = vpop.f32.mrf.mxu0
      %v1495 = vadd.f32 %v1401, %v1494
      %1496 = vmatprep.mubr.f32.mxu0 0.0
      %1497 = vmatmul.mubr.f32.gmra.mxu0 %v1415
      %v1498 = vpop.f32.mrf.mxu0
      %v1499 = vadd.f32 %v1405, %v1498
      %v1500 = vpop.f32.mrf.mxu0
      %v1501 = vadd.f32 %v1405, %v1500
      %1502 = vmatprep.mubr.f32.mxu0 0.0
      %1503 = vmatmul.mubr.f32.gmra.mxu0 %v1418
      %v1504 = vpop.f32.mrf.mxu0
      %v1505 = vadd.f32 %v1409, %v1504
      %v1506 = vpop.f32.mrf.mxu0
      %v1507 = vadd.f32 %v1409, %v1506
      %1508 = vdwg.mxu0
      %vm1509 = vcmp.gt.f32.partialorder %v1493, 0.0
      %vm1510 = vcmp.gt.f32.partialorder %v1495, 0.0
      %vm1511 = vcmp.gt.f32.partialorder %v1499, 0.0
      %vm1512 = vcmp.gt.f32.partialorder %v1501, 0.0
      %vm1513 = vcmp.gt.f32.partialorder %v1505, 0.0
      %vm1514 = vcmp.gt.f32.partialorder %v1507, 0.0
      %v1515 = vmul.f32 %v1493, 0.01
      %v1516 = vmul.f32 %v1495, 0.01
      %v1517 = vmul.f32 %v1499, 0.01
      %v1518 = vmul.f32 %v1501, 0.01
      %v1519 = vmul.f32 %v1505, 0.01
      %v1520 = vmul.f32 %v1507, 0.01
      %v1521 = vsel %vm1509, %v1493, %v1515
      %v1522 = vsel %vm1510, %v1495, %v1516
      %v1523 = vsel %vm1511, %v1499, %v1517
      %v1524 = vsel %vm1512, %v1501, %v1518
      %v1525 = vsel %vm1513, %v1505, %v1519
      %v1526 = vsel %vm1514, %v1507, %v1520
      %v1527 = vadd.f32 %v1521, %v1523
      %v1528 = vsel %vm454, %v1525, 0.0
      %v1529 = vadd.f32 %v1527, %v1528
      %v1530 = vrot.slane %v1529, 4
      %v1531 = vadd.f32 %v1529, %v1530
      %v1532 = vrot.slane %v1531, 2
      %v1533 = vadd.f32 %v1531, %v1532
      %v1534 = vrot.slane %v1533, 1
      %v1535 = vadd.f32 %v1533, %v1534
      %v1536 = vadd.f32 %v1522, %v1524
      %v1537 = vsel %vm454, %v1526, 0.0
      %v1538 = vadd.f32 %v1536, %v1537
      %v1539 = vrot.slane %v1538, 4
      %v1540 = vadd.f32 %v1538, %v1539
      %v1541 = vrot.slane %v1540, 2
      %v1542 = vadd.f32 %v1540, %v1541
      %v1543 = vrot.slane %v1542, 1
      %v1544 = vadd.f32 %v1542, %v1543
      %v1545 = vmul.f32 %v1535, %v472
      %v1546 = vmul.f32 %v1544, %v472
      %v1547 = vsub.f32 %v1521, %v1545
      %v1548 = vsub.f32 %v1522, %v1546
      %v1549 = vsub.f32 %v1523, %v1545
      %v1550 = vsub.f32 %v1524, %v1546
      %v1551 = vsub.f32 %v1525, %v1545
      %v1552 = vsub.f32 %v1526, %v1546
      %v1553 = vmul.f32 %v1547, %v1547
      %v1554 = vmul.f32 %v1548, %v1548
      %v1555 = vmul.f32 %v1549, %v1549
      %v1556 = vmul.f32 %v1550, %v1550
      %v1557 = vmul.f32 %v1551, %v1551
      %v1558 = vmul.f32 %v1552, %v1552
      %v1559 = vadd.f32 %v1553, %v1555
      %v1560 = vsel %vm454, %v1557, 0.0
      %v1561 = vadd.f32 %v1559, %v1560
      %v1562 = vrot.slane %v1561, 4
      %v1563 = vadd.f32 %v1561, %v1562
      %v1564 = vrot.slane %v1563, 2
      %v1565 = vadd.f32 %v1563, %v1564
      %v1566 = vrot.slane %v1565, 1
      %v1567 = vadd.f32 %v1565, %v1566
      %v1568 = vadd.f32 %v1554, %v1556
      %v1569 = vsel %vm454, %v1558, 0.0
      %v1570 = vadd.f32 %v1568, %v1569
      %v1571 = vrot.slane %v1570, 4
      %v1572 = vadd.f32 %v1570, %v1571
      %v1573 = vrot.slane %v1572, 2
      %v1574 = vadd.f32 %v1572, %v1573
      %v1575 = vrot.slane %v1574, 1
      %v1576 = vadd.f32 %v1574, %v1575
      %v1577 = vmul.f32 %v1567, %v472
      %v1578 = vmul.f32 %v1576, %v472
      %v1579 = vadd.f32 %v1577, 1e-05
      %v1580 = vadd.f32 %v1578, 1e-05
      %v1581 = vrsqrt.pop %v1579
      %v1582 = vrsqrt.pop %v1580
      %v1583 = vmul.f32 %v1547, %v1581
      %v1584 = vmul.f32 %v1548, %v1582
      %v1585 = vmul.f32 %v1549, %v1581
      %v1586 = vmul.f32 %v1550, %v1582
      %v1587 = vmul.f32 %v1551, %v1581
      %v1588 = vmul.f32 %v1552, %v1582
      %v1590 = vsel %vm454, %v1397, 0
      %v1593 = vsel %vm454, %v1398, 0
      %1595 = vmatprep.subr.mxu0 0.0
      %1596 = vmatpush1.msra.mxu0 0.0
      %1597 = vmatprep.subr.mxu0 0.0
      %1598 = vmatpush1.msra.mxu0 0.0
      %1599 = vmatprep.subr.mxu0 0.0
      %1600 = vmatpush1.msra.mxu0 0.0
      %1601 = vmatprep.subr.mxu0 0.0
      %1602 = vmatpush1.msra.mxu0 0.0
      %1603 = vmatprep.subr.mxu0 0.0
      %1604 = vmatpush1.msra.mxu0 0.0
      %1605 = vmatprep.subr.mxu0 0.0
      %1606 = vmatpush1.msra.mxu0 0.0
      %1607 = vmatprep.subr.mxu0 0.0
      %1608 = vmatpush1.msra.mxu0 0.0
      %1609 = vmatprep.subr.mxu0 0.0
      %1610 = vmatpush1.msra.mxu0 0.0
      %1611 = vmatprep.subr.mxu0 0.0
      %1612 = vmatpush1.msra.mxu0 0.0
      %1613 = vmatprep.subr.mxu0 0.0
      %1614 = vmatpush1.msra.mxu0 0.0
      %1615 = vmatprep.subr.mxu0 0.0
      %1616 = vmatpush1.msra.mxu0 0.0
      %1617 = vmatprep.subr.mxu0 0.0
      %1618 = vmatpush1.msra.mxu0 0.0
      %1619 = vmatprep.subr.mxu0 0.0
      %1620 = vmatpush1.msra.mxu0 0.0
      %1621 = vmatprep.subr.mxu0 %v1593
      %1622 = vmatpush1.msra.mxu0 %v1590
      %1623 = vmatprep.subr.mxu0 %v1396
      %1624 = vmatpush1.msra.mxu0 %v1395
      %1625 = vmatprep.subr.mxu0 %v1394
      %1626 = vmatpush1.msra.mxu0 %v1393
      %1627 = vmatprep.subr.mxu0 0.0
      %1628 = vmatpush2.msra.mxu0 0.0
      %1629 = vmatprep.subr.mxu0 0.0
      %1630 = vmatpush2.msra.mxu0 0.0
      %1631 = vmatprep.subr.mxu0 0.0
      %1632 = vmatpush2.msra.mxu0 0.0
      %1633 = vmatprep.subr.mxu0 0.0
      %1634 = vmatpush2.msra.mxu0 0.0
      %1635 = vmatprep.subr.mxu0 0.0
      %1636 = vmatpush2.msra.mxu0 0.0
      %1637 = vmatprep.subr.mxu0 0.0
      %1638 = vmatpush2.msra.mxu0 0.0
      %1639 = vmatprep.subr.mxu0 0.0
      %1640 = vmatpush2.msra.mxu0 0.0
      %1641 = vmatprep.subr.mxu0 0.0
      %1642 = vmatpush2.msra.mxu0 0.0
      %1643 = vmatprep.subr.mxu0 0.0
      %1644 = vmatpush2.msra.mxu0 0.0
      %1645 = vmatprep.subr.mxu0 0.0
      %1646 = vmatpush2.msra.mxu0 0.0
      %1647 = vmatprep.subr.mxu0 0.0
      %1648 = vmatpush2.msra.mxu0 0.0
      %1649 = vmatprep.subr.mxu0 0.0
      %1650 = vmatpush2.msra.mxu0 0.0
      %1651 = vmatprep.subr.mxu0 0.0
      %1652 = vmatpush2.msra.mxu0 0.0
      %1653 = vmatprep.subr.mxu0 0.0
      %1654 = vmatpush2.msra.mxu0 0.0
      %1655 = vmatprep.subr.mxu0 0.0
      %1656 = vmatpush2.msra.mxu0 0.0
      %1657 = vmatprep.subr.mxu0 0.0
      %1658 = vmatpush2.msra.mxu0 0.0
      %1659 = vmatprep.mubr.f32.mxu0 0.0
      %1660 = vmatmul.mubr.f32.gmra.mxu0 %v1412
      %v1661 = vpop.f32.mrf.mxu0
      %v1662 = vadd.f32 %v1401, %v1661
      %v1663 = vpop.f32.mrf.mxu0
      %v1664 = vadd.f32 %v1401, %v1663
      %1665 = vmatprep.mubr.f32.mxu0 0.0
      %1666 = vmatmul.mubr.f32.gmra.mxu0 %v1415
      %v1667 = vpop.f32.mrf.mxu0
      %v1668 = vadd.f32 %v1405, %v1667
      %v1669 = vpop.f32.mrf.mxu0
      %v1670 = vadd.f32 %v1405, %v1669
      %1671 = vmatprep.mubr.f32.mxu0 0.0
      %1672 = vmatmul.mubr.f32.gmra.mxu0 %v1418
      %v1673 = vpop.f32.mrf.mxu0
      %v1674 = vadd.f32 %v1409, %v1673
      %v1675 = vpop.f32.mrf.mxu0
      %v1676 = vadd.f32 %v1409, %v1675
      %1677 = vdwg.mxu0
      %vm1678 = vcmp.gt.f32.partialorder %v1662, 0.0
      %vm1679 = vcmp.gt.f32.partialorder %v1664, 0.0
      %vm1680 = vcmp.gt.f32.partialorder %v1668, 0.0
      %vm1681 = vcmp.gt.f32.partialorder %v1670, 0.0
      %vm1682 = vcmp.gt.f32.partialorder %v1674, 0.0
      %vm1683 = vcmp.gt.f32.partialorder %v1676, 0.0
      %v1684 = vmul.f32 %v1662, 0.01
      %v1685 = vmul.f32 %v1664, 0.01
      %v1686 = vmul.f32 %v1668, 0.01
      %v1687 = vmul.f32 %v1670, 0.01
      %v1688 = vmul.f32 %v1674, 0.01
      %v1689 = vmul.f32 %v1676, 0.01
      %v1690 = vsel %vm1678, %v1662, %v1684
      %v1691 = vsel %vm1679, %v1664, %v1685
      %v1692 = vsel %vm1680, %v1668, %v1686
      %v1693 = vsel %vm1681, %v1670, %v1687
      %v1694 = vsel %vm1682, %v1674, %v1688
      %v1695 = vsel %vm1683, %v1676, %v1689
      %v1696 = vadd.f32 %v1690, %v1692
      %v1697 = vsel %vm454, %v1694, 0.0
      %v1698 = vadd.f32 %v1696, %v1697
      %v1699 = vrot.slane %v1698, 4
      %v1700 = vadd.f32 %v1698, %v1699
      %v1701 = vrot.slane %v1700, 2
      %v1702 = vadd.f32 %v1700, %v1701
      %v1703 = vrot.slane %v1702, 1
      %v1704 = vadd.f32 %v1702, %v1703
      %v1705 = vadd.f32 %v1691, %v1693
      %v1706 = vsel %vm454, %v1695, 0.0
      %v1707 = vadd.f32 %v1705, %v1706
      %v1708 = vrot.slane %v1707, 4
      %v1709 = vadd.f32 %v1707, %v1708
      %v1710 = vrot.slane %v1709, 2
      %v1711 = vadd.f32 %v1709, %v1710
      %v1712 = vrot.slane %v1711, 1
      %v1713 = vadd.f32 %v1711, %v1712
      %v1714 = vmul.f32 %v1704, %v472
      %v1715 = vmul.f32 %v1713, %v472
      %v1716 = vsub.f32 %v1690, %v1714
      %v1717 = vsub.f32 %v1691, %v1715
      %v1718 = vsub.f32 %v1692, %v1714
      %v1719 = vsub.f32 %v1693, %v1715
      %v1720 = vsub.f32 %v1694, %v1714
      %v1721 = vsub.f32 %v1695, %v1715
      %v1722 = vmul.f32 %v1716, %v1716
      %v1723 = vmul.f32 %v1717, %v1717
      %v1724 = vmul.f32 %v1718, %v1718
      %v1725 = vmul.f32 %v1719, %v1719
      %v1726 = vmul.f32 %v1720, %v1720
      %v1727 = vmul.f32 %v1721, %v1721
      %v1728 = vadd.f32 %v1722, %v1724
      %v1729 = vsel %vm454, %v1726, 0.0
      %v1730 = vadd.f32 %v1728, %v1729
      %v1731 = vrot.slane %v1730, 4
      %v1732 = vadd.f32 %v1730, %v1731
      %v1733 = vrot.slane %v1732, 2
      %v1734 = vadd.f32 %v1732, %v1733
      %v1735 = vrot.slane %v1734, 1
      %v1736 = vadd.f32 %v1734, %v1735
      %v1737 = vadd.f32 %v1723, %v1725
      %v1738 = vsel %vm454, %v1727, 0.0
      %v1739 = vadd.f32 %v1737, %v1738
      %v1740 = vrot.slane %v1739, 4
      %v1741 = vadd.f32 %v1739, %v1740
      %v1742 = vrot.slane %v1741, 2
      %v1743 = vadd.f32 %v1741, %v1742
      %v1744 = vrot.slane %v1743, 1
      %v1745 = vadd.f32 %v1743, %v1744
      %v1746 = vmul.f32 %v1736, %v472
      %v1747 = vmul.f32 %v1745, %v472
      %v1748 = vadd.f32 %v1746, 1e-05
      %v1749 = vadd.f32 %v1747, 1e-05
      %v1750 = vrsqrt.pop %v1748
      %v1751 = vrsqrt.pop %v1749
      %v1752 = vmul.f32 %v1716, %v1750
      %v1753 = vmul.f32 %v1717, %v1751
      %v1754 = vmul.f32 %v1718, %v1750
      %v1755 = vmul.f32 %v1719, %v1751
      %v1756 = vmul.f32 %v1720, %v1750
      %v1757 = vmul.f32 %v1721, %v1751
      %1758 = vset.pattern.permute.xlu0 4
      %1759 = vperm.xlu0 %1758, %v243
      %v1760 = vpop.permute.xlu0 %1759
      %v1763 = vsel %vm692, %v242, 0
      %v1766 = vsel %vm454, %v1587, 0
      %v1769 = vsel %vm454, %v1588, 0
      %1771 = vmatprep.subr.mxu0 0.0
      %1772 = vmatpush1.msra.mxu0 0.0
      %1773 = vmatprep.subr.mxu0 0.0
      %1774 = vmatpush1.msra.mxu0 0.0
      %1775 = vmatprep.subr.mxu0 0.0
      %1776 = vmatpush1.msra.mxu0 0.0
      %1777 = vmatprep.subr.mxu0 0.0
      %1778 = vmatpush1.msra.mxu0 0.0
      %1779 = vmatprep.subr.mxu0 0.0
      %1780 = vmatpush1.msra.mxu0 0.0
      %1781 = vmatprep.subr.mxu0 0.0
      %1782 = vmatpush1.msra.mxu0 0.0
      %1783 = vmatprep.subr.mxu0 0.0
      %1784 = vmatpush1.msra.mxu0 0.0
      %1785 = vmatprep.subr.mxu0 0.0
      %1786 = vmatpush1.msra.mxu0 0.0
      %1787 = vmatprep.subr.mxu0 0.0
      %1788 = vmatpush1.msra.mxu0 0.0
      %1789 = vmatprep.subr.mxu0 0.0
      %1790 = vmatpush1.msra.mxu0 0.0
      %1791 = vmatprep.subr.mxu0 0.0
      %1792 = vmatpush1.msra.mxu0 0.0
      %1793 = vmatprep.subr.mxu0 0.0
      %1794 = vmatpush1.msra.mxu0 0.0
      %1795 = vmatprep.subr.mxu0 0.0
      %1796 = vmatpush1.msra.mxu0 0.0
      %1797 = vmatprep.subr.mxu0 %v1769
      %1798 = vmatpush1.msra.mxu0 %v1766
      %1799 = vmatprep.subr.mxu0 %v1586
      %1800 = vmatpush1.msra.mxu0 %v1585
      %1801 = vmatprep.subr.mxu0 %v1584
      %1802 = vmatpush1.msra.mxu0 %v1583
      %1803 = vmatprep.subr.mxu0 0.0
      %1804 = vmatpush2.msra.mxu0 0.0
      %1805 = vmatprep.subr.mxu0 0.0
      %1806 = vmatpush2.msra.mxu0 0.0
      %1807 = vmatprep.subr.mxu0 0.0
      %1808 = vmatpush2.msra.mxu0 0.0
      %1809 = vmatprep.subr.mxu0 0.0
      %1810 = vmatpush2.msra.mxu0 0.0
      %1811 = vmatprep.subr.mxu0 0.0
      %1812 = vmatpush2.msra.mxu0 0.0
      %1813 = vmatprep.subr.mxu0 0.0
      %1814 = vmatpush2.msra.mxu0 0.0
      %1815 = vmatprep.subr.mxu0 0.0
      %1816 = vmatpush2.msra.mxu0 0.0
      %1817 = vmatprep.subr.mxu0 0.0
      %1818 = vmatpush2.msra.mxu0 0.0
      %1819 = vmatprep.subr.mxu0 0.0
      %1820 = vmatpush2.msra.mxu0 0.0
      %1821 = vmatprep.subr.mxu0 0.0
      %1822 = vmatpush2.msra.mxu0 0.0
      %1823 = vmatprep.subr.mxu0 0.0
      %1824 = vmatpush2.msra.mxu0 0.0
      %1825 = vmatprep.subr.mxu0 0.0
      %1826 = vmatpush2.msra.mxu0 0.0
      %1827 = vmatprep.subr.mxu0 0.0
      %1828 = vmatpush2.msra.mxu0 0.0
      %1829 = vmatprep.subr.mxu0 0.0
      %1830 = vmatpush2.msra.mxu0 0.0
      %1831 = vmatprep.subr.mxu0 0.0
      %1832 = vmatpush2.msra.mxu0 0.0
      %1833 = vmatprep.subr.mxu0 0.0
      %1834 = vmatpush2.msra.mxu0 0.0
      %1835 = vmatprep.mubr.f32.mxu0 0.0
      %1836 = vmatmul.mubr.f32.gmra.mxu0 %v1763
      %v1837 = vpop.f32.mrf.mxu0
      %v1838 = vadd.f32 %v1760, %v1837
      %v1839 = vpop.f32.mrf.mxu0
      %v1840 = vadd.f32 %v1760, %v1839
      %1841 = vdwg.mxu0
      %1842 = vst [vmem:[%s226] sm:$0xff] %v1838
      %1843 = vst [vmem:[%s226 + $0x8] sm:$0xff] %v1840
      %v1845 = vsel %vm454, %v1756, 0
      %v1848 = vsel %vm454, %v1757, 0
      %1850 = vmatprep.subr.mxu0 0.0
      %1851 = vmatpush1.msra.mxu0 0.0
      %1852 = vmatprep.subr.mxu0 0.0
      %1853 = vmatpush1.msra.mxu0 0.0
      %1854 = vmatprep.subr.mxu0 0.0
      %1855 = vmatpush1.msra.mxu0 0.0
      %1856 = vmatprep.subr.mxu0 0.0
      %1857 = vmatpush1.msra.mxu0 0.0
      %1858 = vmatprep.subr.mxu0 0.0
      %1859 = vmatpush1.msra.mxu0 0.0
      %1860 = vmatprep.subr.mxu0 0.0
      %1861 = vmatpush1.msra.mxu0 0.0
      %1862 = vmatprep.subr.mxu0 0.0
      %1863 = vmatpush1.msra.mxu0 0.0
      %1864 = vmatprep.subr.mxu0 0.0
      %1865 = vmatpush1.msra.mxu0 0.0
      %1866 = vmatprep.subr.mxu0 0.0
      %1867 = vmatpush1.msra.mxu0 0.0
      %1868 = vmatprep.subr.mxu0 0.0
      %1869 = vmatpush1.msra.mxu0 0.0
      %1870 = vmatprep.subr.mxu0 0.0
      %1871 = vmatpush1.msra.mxu0 0.0
      %1872 = vmatprep.subr.mxu0 0.0
      %1873 = vmatpush1.msra.mxu0 0.0
      %1874 = vmatprep.subr.mxu0 0.0
      %1875 = vmatpush1.msra.mxu0 0.0
      %1876 = vmatprep.subr.mxu0 %v1848
      %1877 = vmatpush1.msra.mxu0 %v1845
      %1878 = vmatprep.subr.mxu0 %v1755
      %1879 = vmatpush1.msra.mxu0 %v1754
      %1880 = vmatprep.subr.mxu0 %v1753
      %1881 = vmatpush1.msra.mxu0 %v1752
      %1882 = vmatprep.subr.mxu0 0.0
      %1883 = vmatpush2.msra.mxu0 0.0
      %1884 = vmatprep.subr.mxu0 0.0
      %1885 = vmatpush2.msra.mxu0 0.0
      %1886 = vmatprep.subr.mxu0 0.0
      %1887 = vmatpush2.msra.mxu0 0.0
      %1888 = vmatprep.subr.mxu0 0.0
      %1889 = vmatpush2.msra.mxu0 0.0
      %1890 = vmatprep.subr.mxu0 0.0
      %1891 = vmatpush2.msra.mxu0 0.0
      %1892 = vmatprep.subr.mxu0 0.0
      %1893 = vmatpush2.msra.mxu0 0.0
      %1894 = vmatprep.subr.mxu0 0.0
      %1895 = vmatpush2.msra.mxu0 0.0
      %1896 = vmatprep.subr.mxu0 0.0
      %1897 = vmatpush2.msra.mxu0 0.0
      %1898 = vmatprep.subr.mxu0 0.0
      %1899 = vmatpush2.msra.mxu0 0.0
      %1900 = vmatprep.subr.mxu0 0.0
      %1901 = vmatpush2.msra.mxu0 0.0
      %1902 = vmatprep.subr.mxu0 0.0
      %1903 = vmatpush2.msra.mxu0 0.0
      %1904 = vmatprep.subr.mxu0 0.0
      %1905 = vmatpush2.msra.mxu0 0.0
      %1906 = vmatprep.subr.mxu0 0.0
      %1907 = vmatpush2.msra.mxu0 0.0
      %1908 = vmatprep.subr.mxu0 0.0
      %1909 = vmatpush2.msra.mxu0 0.0
      %1910 = vmatprep.subr.mxu0 0.0
      %1911 = vmatpush2.msra.mxu0 0.0
      %1912 = vmatprep.subr.mxu0 0.0
      %1913 = vmatpush2.msra.mxu0 0.0
      %1914 = vmatprep.mubr.f32.mxu0 0.0
      %1915 = vmatmul.mubr.f32.gmra.mxu0 %v1763
      %v1916 = vpop.f32.mrf.mxu0
      %v1917 = vadd.f32 %v1760, %v1916
      %v1918 = vpop.f32.mrf.mxu0
      %v1919 = vadd.f32 %v1760, %v1918
      %1920 = vdwg.mxu0
      %1921 = vst [vmem:[%s226 + $0x10] sm:$0xff] %v1917
      %1922 = vst [vmem:[%s226 + $0x18] sm:$0xff] %v1919
      %s1923 = smul.u32 4, %s16
      %p1924 = scmp.lt.s32.totalorder %s1923, 7
      %s1925 = scalar_select %p1924, %s1923, 7
      %s1926 = smul.addr %s1925, 8
      %s1927 = scalar_lea.vmem %s5, %s1926
      // Predicated region
      $region41: #{optnet_forward.1} parent=39 // pred_check
        %p1928 = pneg %p144
      $region42: #{optnet_forward.1} parent=39 // pred_check_branch
        %1930 = sbr.rel (%p1928) target = $region44
      $region43: #{optnet_forward.1} parent=39 // pred_region
        %s1931 = smul.u32 4, %s16
      $region44: #{optnet_forward.1} parent=39 // pred_fallthru
        _
    $region40: #{optnet_forward.1} parent=5 // pred_fallthru
      _
    %p1932 = scmp.le.s32.totalorder 2, %s11
    // Predicated region
    $region45: #{optnet_forward.1} parent=5 // pred_check
      %p1933 = pneg %p1932
    $region46: #{optnet_forward.1} parent=5 // pred_check_branch
      %1935 = sbr.rel (%p1933) target = $region48
    $region47: #{optnet_forward.1} parent=5 // pred_region
      %s1936 = ssub.s32 %s11, 2
      // Predicated region
      $region49: #{optnet_forward.1} parent=47 // pred_check
        %p1937 = pneg %p150
      $region50: #{optnet_forward.1} parent=47 // pred_check_branch
        %1939 = sbr.rel (%p1937) target = $region52
      $region51: #{optnet_forward.1} parent=47 // pred_region
        %s1940 = smul.u32 4, %s17
        %p1941 = scmp.lt.s32.totalorder %s1940, 7
        %s1942 = scalar_select %p1941, %s1940, 7
        %s1943 = smul.addr %s1942, 8
        %s1944 = scalar_lea.vmem %s5, %s1943
      $region52: #{optnet_forward.1} parent=47 // pred_fallthru
        _
    $region48: #{optnet_forward.1} parent=5 // pred_fallthru
      _
  $region6: #{optnet_forward.1} parent=0 // loop_footer
    %s15 = sadd.s32 1, %s11
  $region7: #{optnet_forward.1} parent=0 // loop_footer_branch
    %10 = sbr.rel target = $region3
  $region8: #{optnet_forward.1} parent=0 // loop_exit
    _

</llo_original>
